<compile_context>
chip_gen: v7x
topology: tpu7x:2x2x1
jax: 0.10.0
libtpu: 0.0.40
codegen_flags: <defaults>
</compile_context>

<pallas_src>
import functools

import jax
import jax.numpy as jnp
from jax import lax
from jax.experimental import pallas as pl
from jax.experimental.pallas import tpu as pltpu


def _round_up(x, m):
    return (x + m - 1) // m * m


def _vmem_limit_bytes():
    """Per-generation VMEM budget (v7x has 64 MiB/TC, v5e/v6e have 128 MiB)."""
    cap = 64 * 1024 * 1024
    try:
        info = pltpu.get_tpu_info()
        cap = int(getattr(info, "vmem_capacity_bytes", 0) or cap)
    except Exception:  # interpret mode / very old runtime: keep conservative default
        pass
    # ~96 MiB on 128 MiB parts, ~48 MiB on v7x; leave headroom for Mosaic scratch.
    return min(100 * 1024 * 1024, cap * 3 // 4)


def _pick_row_tile(H, W, Cin, c_store, out_bytes, upsample, vmem_limit):
    """Largest even row tile dividing H whose pipeline footprint fits the VMEM budget."""
    lane_in = _round_up(max(Cin, 1), 128)
    lane_k = _round_up(3 * Cin, 128)
    lane_out = _round_up(c_store, 128)
    sub_wp = _round_up(W + 2, 8)
    sub_w = _round_up(W, 8)

    def per_step(th):
        rows_out = 2 * th if upsample else th
        in_tile = th * sub_wp * lane_in * 2              # bf16 row tile
        halo = 8 * sub_wp * lane_in * 2                  # 2-row halo tile (over-estimated)
        out_tile = rows_out * sub_w * lane_out * out_bytes
        xk_tmp = (th + 2) * sub_w * lane_k * 2           # in-kernel packed operand
        acc_tmp = _round_up(th * W, 8) * lane_out * 4    # f32 accumulator
        # inputs/outputs are double-buffered by the pipeline; temps get a 2x safety factor
        return 2 * (in_tile + halo + out_tile) + 2 * (xk_tmp + acc_tmp)

    fixed = 2 * (3 * _round_up(3 * Cin, 8) * lane_out * 2 + 8 * lane_out * 4)  # w + b
    budget = vmem_limit - fixed - (8 << 20)
    best = 2
    for th in range(2, H + 1, 2):
        if H % th:
            continue
        if per_step(th) > budget:
            break
        best = th
        if th * W >= 4096:  # big enough to amortize ~0.35us/step; keep >1 tile when possible
            break
    return best


def _conv3x3_bn_relu_kernel(xa_ref, xb_ref, w_ref, b_ref, o_ref, *, th, W, Cin, Cp,
                            upsample):
    """One (batch, row-tile) grid step.

    xa_ref: (1, th, W+2, Cin) bf16  padded NHWC rows [i*th, i*th + th)
    xb_ref: (1, 2,  W+2, Cin) bf16  halo rows        [i*th + th, i*th + th + 2)
    w_ref:  (3, 3*Cin, Cp)    bf16  per-dy weights, dx packed into K (BN scale folded)
    b_ref:  (1, Cp)           f32   folded BN bias
    o_ref:  (1, th, W, Cp)          if upsample=False
            (1, 2*th, W, 2*Cp)      if upsample=True (duplicated cols packed in lanes)
    """
    K = 3 * Cin
    # (th + 2, W + 2, Cin) window: row tile + its 2 halo rows (leading-dim concat only).
    # TODO(synk): replace the two views + concat with one overlapping pl.Element(th+2)
    # window once that path is validated on this JAX version.
    x = jnp.concatenate([xa_ref[0], xb_ref[0]], axis=0)

    # In-VMEM im2col along dx: (th + 2, W, 3*Cin). The sublane-offset slices / lane concat
    # run on otherwise-idle VPU/XLU slots (kernel is HBM-bound), and replace the 3x input
    # HBM duplication the old wrapper paid for.
    xk = jnp.concatenate([x[:, 0:W, :], x[:, 1:W + 1, :], x[:, 2:W + 2, :]], axis=-1)

    # 3x3 conv as 3 MXU matmuls with K = 3*Cin; register accumulation in f32.
    acc = jnp.dot(xk[0:th].reshape(th * W, K), w_ref[0],
                  preferred_element_type=jnp.float32)
    acc = acc + jnp.dot(xk[1:th + 1].reshape(th * W, K), w_ref[1],
                        preferred_element_type=jnp.float32)
    acc = acc + jnp.dot(xk[2:th + 2].reshape(th * W, K), w_ref[2],
                        preferred_element_type=jnp.float32)

    # Fused BatchNorm bias + ReLU epilogue; single store.
    y = jnp.maximum(acc + b_ref[...], 0.0).astype(o_ref.dtype).reshape(th, W, Cp)

    if upsample:
        # Fused 2x nearest upsample:
        #  - columns: duplicate along lanes -> (th, W, 2*Cp); the wrapper's free
        #    contiguous reshape turns (N, 2H, W, 2*Cp) into (N, 2H, 2W, Cp).
        #  - rows: duplicate along a leading (non-tiled) dim.
        y = jnp.concatenate([y, y], axis=-1)                       # (th, W, 2*Cp)
        y = jnp.concatenate([y[:, None], y[:, None]], axis=1)      # (th, 2, W, 2*Cp)
        o_ref[...] = y.reshape(1, 2 * th, W, 2 * Cp)
    else:
        o_ref[...] = y.reshape(1, th, W, Cp)


def conv3x3_gn_relu(x_nchw, weight, gamma, beta, running_mean, running_var,
                    eps=1e-5, upsample=False, out_dtype=jnp.float32):
    """Forward pass of Conv3x3GNReLU (inference-mode BatchNorm2d)."""
    N, Cin, H, W = x_nchw.shape
    Cout = weight.shape[0]
    assert H % 2 == 0, "H must be even (even row tiles keep the 2-row halo view aligned)"
    K = 3 * Cin

    # Output-channel padding policy: lane-dense (x128) stores only when the padding adds
    # <= 12.5% extra HBM writes; small Cout takes the masked store instead.
    cp128 = _round_up(Cout, 128)
    Cp = cp128 if cp128 * 8 <= Cout * 9 else Cout
    # Note: out_dtype=jnp.bfloat16 halves output HBM/VMEM if the consumer allows it.
    out_bytes = jnp.dtype(out_dtype).itemsize

    vmem_limit = _vmem_limit_bytes()
    th = _pick_row_tile(H, W, Cin, (2 * Cp) if upsample else Cp, out_bytes, upsample,
                        vmem_limit)
    nT = H // th

    # ---- parameter prep (tiny, trace time) ----
    scale = gamma / jnp.sqrt(running_var + eps)               # (Cout,)
    bias = beta - running_mean * scale                        # (Cout,)
    w = jnp.transpose(weight, (2, 3, 1, 0)) * scale           # (3, 3, Cin, Cout), BN folded
    w = jnp.pad(w, ((0, 0), (0, 0), (0, 0), (0, Cp - Cout)))
    w = w.reshape(3, K, Cp).astype(jnp.bfloat16)              # dx packed into K (dx*Cin + c)
    bias_p = jnp.pad(bias, (0, Cp - Cout)).reshape(1, Cp).astype(jnp.float32)

    # ---- activation prep: bf16 cast, NCHW -> NHWC, exactly the 1-px conv halo pad ----
    # TODO(synk): keep activations NHWC end-to-end so this transpose and the final one
    # disappear entirely.
    xh = jnp.transpose(x_nchw.astype(jnp.bfloat16), (0, 2, 3, 1))   # (N, H, W, Cin)
    xp = jnp.pad(xh, ((0, 0), (1, 1), (1, 1), (0, 0)))              # (N, H+2, W+2, Cin)

    if upsample:
        out_shape = jax.ShapeDtypeStruct((N, 2 * H, W, 2 * Cp), out_dtype)
        out_spec = pl.BlockSpec((1, 2 * th, W, 2 * Cp), lambda n, i: (n, i, 0, 0))
    else:
        out_shape = jax.ShapeDtypeStruct((N, H, W, Cp), out_dtype)
        out_spec = pl.BlockSpec((1, th, W, Cp), lambda n, i: (n, i, 0, 0))

    kernel = functools.partial(_conv3x3_bn_relu_kernel, th=th, W=W, Cin=Cin, Cp=Cp,
                               upsample=upsample)
    out = pl.pallas_call(
        kernel,
        out_shape=out_shape,
        grid_spec=pltpu.PrefetchScalarGridSpec(
            num_scalar_prefetch=0,
            grid=(N, nT),
            in_specs=[
                # row tile: padded rows [i*th, i*th + th)
                pl.BlockSpec((1, th, W + 2, Cin), lambda n, i: (n, i, 0, 0)),
                # 2-row halo view of the same array (block units of 2 rows)
                pl.BlockSpec((1, 2, W + 2, Cin),
                             lambda n, i: (n, (i + 1) * (th // 2), 0, 0)),
                # TODO(synk): pin w/b single-buffered (pipeline_mode=pl.Buffered(1)) to
                # reclaim their second VMEM buffer on v7x.
                pl.BlockSpec((3, K, Cp), lambda n, i: (0, 0, 0)),
                pl.BlockSpec((1, Cp), lambda n, i: (0, 0)),
            ],
            out_specs=out_spec,
        ),
        compiler_params=pltpu.CompilerParams(
            dimension_semantics=("parallel", "parallel"),
            vmem_limit_bytes=vmem_limit,
        ),
    )(xp, xp, w, bias_p)

    if upsample:
        # (N, 2H, W, 2*Cp) -> (N, 2H, 2W, Cp): contiguous reshape, no extra HBM pass.
        out = out.reshape(N, 2 * H, 2 * W, Cp)
    if Cp != Cout:
        out = out[..., :Cout]                   # fuses with the transpose below (one pass)
    return jnp.transpose(out, (0, 3, 1, 2))     # NHWC -> NCHW


def reference(x, weight, gamma, beta, mean, var, eps=1e-5, upsample=False):
    scale = gamma / jnp.sqrt(var + eps)
    bias = beta - mean * scale
    # Match the kernel's bf16 operand rounding (accumulation stays f32 on the MXU).
    xb = x.astype(jnp.bfloat16).astype(jnp.float32)
    wb = (weight * scale[:, None, None, None]).astype(jnp.bfloat16).astype(jnp.float32)
    y = lax.conv_general_dilated(
        xb, wb, window_strides=(1, 1), padding=((1, 1), (1, 1)),
        dimension_numbers=("NCHW", "OIHW", "NCHW"),
        preferred_element_type=jnp.float32)
    y = jnp.maximum(y + bias.reshape(1, -1, 1, 1), 0.0)
    if upsample:
        y = jnp.repeat(jnp.repeat(y, 2, axis=2), 2, axis=3)
    return y


if __name__ == "__main__":
    key = jax.random.PRNGKey(0)
    k_x, k_w, k_g, k_b, k_m, k_v = jax.random.split(key, 6)

    N, Cin, H, W = 2, 4, 16, 16
    Cout = 8

    x = jax.random.normal(k_x, (N, Cin, H, W), dtype=jnp.float32)
    weight = jax.random.normal(k_w, (Cout, Cin, 3, 3), dtype=jnp.float32) * 0.1
    gamma = 1.0 + 0.1 * jax.random.normal(k_g, (Cout,), dtype=jnp.float32)
    beta = 0.1 * jax.random.normal(k_b, (Cout,), dtype=jnp.float32)
    running_mean = 0.1 * jax.random.normal(k_m, (Cout,), dtype=jnp.float32)
    running_var = jnp.abs(1.0 + 0.1 * jax.random.normal(k_v, (Cout,), dtype=jnp.float32))

    ok = True
    for upsample in (False, True):
        out = conv3x3_gn_relu(x, weight, gamma, beta, running_mean, running_var,
                              upsample=upsample)
        out = jax.block_until_ready(out)
        ref = reference(x, weight, gamma, beta, running_mean, running_var,
                        upsample=upsample)
        expected = (N, Cout, H * (2 if upsample else 1), W * (2 if upsample else 1))
        if out.shape != expected:
            ok = False
        elif not jnp.allclose(out, ref, atol=1e-3, rtol=1e-3):
            ok = False

    print("KERNEL_OK" if ok else "KERNEL_MISMATCH")
</pallas_src>

<mosaic_0001>
module attributes {stable_mosaic.version = 11 : i64} {
  func.func @_conv3x3_bn_relu_kernel(%arg0: i32, %arg1: i32, %arg2: memref<1x16x18x4xbf16, #tpu.memory_space<vmem>>, %arg3: memref<1x2x18x4xbf16, #tpu.memory_space<vmem>>, %arg4: memref<3x12x8xbf16, #tpu.memory_space<vmem>>, %arg5: memref<1x8xf32, #tpu.memory_space<vmem>>, %arg6: memref<1x16x16x8xf32, #tpu.memory_space<vmem>>) attributes {dimension_semantics = [#tpu.dimension_semantics<parallel>, #tpu.dimension_semantics<parallel>], iteration_bounds = array<i64: 2, 1>, scalar_prefetch = 0 : i64, scratch_operands = 0 : i64, tpu.core_type = #tpu.core_type<tc>, window_params = [{transform_indices = @transform_0, window_bounds = array<i64: 1, 16, 18, 4>}, {transform_indices = @transform_1, window_bounds = array<i64: 1, 2, 18, 4>}, {pipeline_mode = #tpu.pipeline_mode<synchronous>, transform_indices = @transform_2, window_bounds = array<i64: 3, 12, 8>}, {pipeline_mode = #tpu.pipeline_mode<synchronous>, transform_indices = @transform_3, window_bounds = array<i64: 1, 8>}, {transform_indices = @transform_4, window_bounds = array<i64: 1, 16, 16, 8>}]} {
    %c0 = arith.constant 0 : index
    %c0_0 = arith.constant 0 : index
    %c0_1 = arith.constant 0 : index
    %c0_2 = arith.constant 0 : index
    %0 = vector.load %arg2[%c0, %c0_0, %c0_1, %c0_2] : memref<1x16x18x4xbf16, #tpu.memory_space<vmem>>, vector<1x16x18x4xbf16>
    %1 = vector.shape_cast %0 : vector<1x16x18x4xbf16> to vector<16x18x4xbf16>
    %c0_3 = arith.constant 0 : index
    %c0_4 = arith.constant 0 : index
    %c0_5 = arith.constant 0 : index
    %c0_6 = arith.constant 0 : index
    %2 = vector.load %arg3[%c0_3, %c0_4, %c0_5, %c0_6] : memref<1x2x18x4xbf16, #tpu.memory_space<vmem>>, vector<1x2x18x4xbf16>
    %3 = vector.shape_cast %2 : vector<1x2x18x4xbf16> to vector<2x18x4xbf16>
    %4 = tpu.concatenate %1, %3 in 0 : vector<16x18x4xbf16>, vector<2x18x4xbf16> -> vector<18x18x4xbf16>
    %5 = vector.extract_strided_slice %4 {offsets = [0, 0, 0], sizes = [18, 16, 4], strides = [1, 1, 1]} : vector<18x18x4xbf16> to vector<18x16x4xbf16>
    %6 = vector.extract_strided_slice %4 {offsets = [0, 1, 0], sizes = [18, 16, 4], strides = [1, 1, 1]} : vector<18x18x4xbf16> to vector<18x16x4xbf16>
    %7 = vector.extract_strided_slice %4 {offsets = [0, 2, 0], sizes = [18, 16, 4], strides = [1, 1, 1]} : vector<18x18x4xbf16> to vector<18x16x4xbf16>
    %8 = tpu.concatenate %5, %6, %7 in 2 : vector<18x16x4xbf16>, vector<18x16x4xbf16>, vector<18x16x4xbf16> -> vector<18x16x12xbf16>
    %9 = vector.extract_strided_slice %8 {offsets = [0, 0, 0], sizes = [16, 16, 12], strides = [1, 1, 1]} : vector<18x16x12xbf16> to vector<16x16x12xbf16>
    %10 = vector.shape_cast %9 : vector<16x16x12xbf16> to vector<256x12xbf16>
    %c0_7 = arith.constant 0 : index
    %c0_8 = arith.constant 0 : index
    %c0_9 = arith.constant 0 : index
    %11 = vector.load %arg4[%c0_7, %c0_8, %c0_9] : memref<3x12x8xbf16, #tpu.memory_space<vmem>>, vector<1x12x8xbf16>
    %12 = vector.shape_cast %11 : vector<1x12x8xbf16> to vector<12x8xbf16>
    %cst = arith.constant dense<0.000000e+00> : vector<256x8xf32>
    %13 = tpu.matmul %10, %12, %cst {dimension_numbers = #tpu.dot_dimension_numbers<[1], [0], [0], [1], [0, 0, 1, 1], [], []>} : vector<256x12xbf16>, vector<12x8xbf16>, vector<256x8xf32> -> vector<256x8xf32>
    %14 = vector.extract_strided_slice %8 {offsets = [1, 0, 0], sizes = [16, 16, 12], strides = [1, 1, 1]} : vector<18x16x12xbf16> to vector<16x16x12xbf16>
    %15 = vector.shape_cast %14 : vector<16x16x12xbf16> to vector<256x12xbf16>
    %c1 = arith.constant 1 : index
    %c0_10 = arith.constant 0 : index
    %c0_11 = arith.constant 0 : index
    %16 = vector.load %arg4[%c1, %c0_10, %c0_11] : memref<3x12x8xbf16, #tpu.memory_space<vmem>>, vector<1x12x8xbf16>
    %17 = vector.shape_cast %16 : vector<1x12x8xbf16> to vector<12x8xbf16>
    %cst_12 = arith.constant dense<0.000000e+00> : vector<256x8xf32>
    %18 = tpu.matmul %15, %17, %cst_12 {dimension_numbers = #tpu.dot_dimension_numbers<[1], [0], [0], [1], [0, 0, 1, 1], [], []>} : vector<256x12xbf16>, vector<12x8xbf16>, vector<256x8xf32> -> vector<256x8xf32>
    %19 = arith.addf %13, %18 : vector<256x8xf32>
    %20 = vector.extract_strided_slice %8 {offsets = [2, 0, 0], sizes = [16, 16, 12], strides = [1, 1, 1]} : vector<18x16x12xbf16> to vector<16x16x12xbf16>
    %21 = vector.shape_cast %20 : vector<16x16x12xbf16> to vector<256x12xbf16>
    %c2 = arith.constant 2 : index
    %c0_13 = arith.constant 0 : index
    %c0_14 = arith.constant 0 : index
    %22 = vector.load %arg4[%c2, %c0_13, %c0_14] : memref<3x12x8xbf16, #tpu.memory_space<vmem>>, vector<1x12x8xbf16>
    %23 = vector.shape_cast %22 : vector<1x12x8xbf16> to vector<12x8xbf16>
    %cst_15 = arith.constant dense<0.000000e+00> : vector<256x8xf32>
    %24 = tpu.matmul %21, %23, %cst_15 {dimension_numbers = #tpu.dot_dimension_numbers<[1], [0], [0], [1], [0, 0, 1, 1], [], []>} : vector<256x12xbf16>, vector<12x8xbf16>, vector<256x8xf32> -> vector<256x8xf32>
    %25 = arith.addf %19, %24 : vector<256x8xf32>
    %c0_16 = arith.constant 0 : index
    %c0_17 = arith.constant 0 : index
    %26 = vector.load %arg5[%c0_16, %c0_17] : memref<1x8xf32, #tpu.memory_space<vmem>>, vector<1x8xf32>
    %27 = vector.broadcast %26 : vector<1x8xf32> to vector<256x8xf32>
    %28 = arith.addf %25, %27 : vector<256x8xf32>
    %cst_18 = arith.constant 0.000000e+00 : f32
    %29 = vector.broadcast %cst_18 : f32 to vector<256x8xf32>
    %30 = arith.maximumf %28, %29 : vector<256x8xf32>
    %31 = vector.shape_cast %30 : vector<256x8xf32> to vector<16x16x8xf32>
    %32 = vector.shape_cast %31 : vector<16x16x8xf32> to vector<1x16x16x8xf32>
    %c0_19 = arith.constant 0 : index
    %c0_20 = arith.constant 0 : index
    %c0_21 = arith.constant 0 : index
    %c0_22 = arith.constant 0 : index
    %33 = vector.load %arg6[%c0_19, %c0_20, %c0_21, %c0_22] : memref<1x16x16x8xf32, #tpu.memory_space<vmem>>, vector<1x16x16x8xf32>
    tpu.vector_store %arg6[%c0_19, %c0_20, %c0_21, %c0_22], %32 {strides = array<i32>} : memref<1x16x16x8xf32, #tpu.memory_space<vmem>>, vector<1x16x16x8xf32>,
    return
  }
  func.func @transform_0(%arg0: i32, %arg1: i32) -> (i32, i32, i32, i32) {
    %c0_i32 = arith.constant 0 : i32
    %c0_i32_0 = arith.constant 0 : i32
    %c0_i32_1 = arith.constant 0 : i32
    return %arg0, %arg1, %c0_i32, %c0_i32_0 : i32, i32, i32, i32
  }
  func.func @transform_1(%arg0: i32, %arg1: i32) -> (i32, i32, i32, i32) {
    %c1_i32 = arith.constant 1 : i32
    %0 = arith.addi %arg1, %c1_i32 : i32
    %c8_i32 = arith.constant 8 : i32
    %1 = arith.muli %0, %c8_i32 : i32
    %c0_i32 = arith.constant 0 : i32
    %c0_i32_0 = arith.constant 0 : i32
    %c0_i32_1 = arith.constant 0 : i32
    return %arg0, %1, %c0_i32, %c0_i32_0 : i32, i32, i32, i32
  }
  func.func @transform_2(%arg0: i32, %arg1: i32) -> (i32, i32, i32) {
    %c0_i32 = arith.constant 0 : i32
    %c0_i32_0 = arith.constant 0 : i32
    %c0_i32_1 = arith.constant 0 : i32
    %c0_i32_2 = arith.constant 0 : i32
    return %c0_i32, %c0_i32_0, %c0_i32_1 : i32, i32, i32
  }
  func.func @transform_3(%arg0: i32, %arg1: i32) -> (i32, i32) {
    %c0_i32 = arith.constant 0 : i32
    %c0_i32_0 = arith.constant 0 : i32
    %c0_i32_1 = arith.constant 0 : i32
    return %c0_i32, %c0_i32_0 : i32, i32
  }
  func.func @transform_4(%arg0: i32, %arg1: i32) -> (i32, i32, i32, i32) {
    %c0_i32 = arith.constant 0 : i32
    %c0_i32_0 = arith.constant 0 : i32
    %c0_i32_1 = arith.constant 0 : i32
    return %arg0, %arg1, %c0_i32, %c0_i32_0 : i32, i32, i32, i32
  }
}

</mosaic_0001>

<llo_original>
// kernel: tpu_custom_call.1
$region0: #{tpu_custom_call.1}
  #allocation0 [shape = 'u32[]', space=smem, size = 0x4, offset = 0x4, fixed_abs, tag = 'smem constant byte address 0x4 - core index']
  #allocation1 [shape = 'u32[144,128]{1,0:T(1,128)}', space=vmem, size = 0x12000, scoped, tag = 'internal scratch']
  %s0 = inlined_call_operand.vmem [shape: bf16[2,18,18,4], index: 0, kind: input, shape index: {}]
  %s1 = inlined_call_operand.vmem [shape: bf16[2,18,18,4], index: 1, kind: input, shape index: {}]
  %s2 = inlined_call_operand.vmem [shape: bf16[3,12,8], index: 2, kind: input, shape index: {}]
  %s3 = inlined_call_operand.vmem [shape: f32[1,8], index: 3, kind: input, shape index: {}]
  %s4 = inlined_call_operand.vmem [shape: f32[2,16,16,8], index: 4, kind: output, shape index: {}]
  %s5 = sld [smem:[#allocation0]]
  $region49: #{tpu_custom_call.1} parent=0
    _
  %s7 = ssub.s32 1, %s5
  %s8 = scalar_select 0, %s7, %s5
  loop: start=0, step=1, limit=4
  $region2: #{tpu_custom_call.1} parent=0 // loop_pre_header
    _
  $region3: #{tpu_custom_call.1} parent=0 // loop_header
    %s10 = sphi 0, %s14
    %p11 = scmp.ge.s32.totalorder %s10, 4
    %s17 = sphi 0, %s29
    %s18 = sphi 0, %s25
    %s19 = sphi 0, %s17
    %s20 = sphi 0, %s18
    %s21 = sphi 0, %s19
    %s22 = sphi 0, %s20
    %s34 = sphi 0, %s36
    %s37 = sphi 0, %s34
    %s38 = sphi 0, %s37
    %s54 = sphi 0, %s38
    %s66 = sphi 0, %s68
    %s69 = sphi 0, %s66
    %s70 = sphi 0, %s69
    %s86 = sphi 0, %s70
    %s90 = sphi 0, %s90
    %s92 = sphi 0, %s90
    %s93 = sphi 0, %s92
    %s107 = sphi 0, %s93
    %s111 = sphi 0, %s111
    %s113 = sphi 0, %s111
    %s114 = sphi 0, %s113
    %s128 = sphi 0, %s114
    %s136 = sphi 0, %s138
    %s139 = sphi 0, %s136
    %s140 = sphi 0, %s139
    %s156 = sphi 0, %s140
  $region4: #{tpu_custom_call.1} parent=0 // loop_header_branch
    %13 = sbr.rel (%p11) target = $region8
  $region5: #{tpu_custom_call.1} parent=0 // loop_body
    %s15 = ssub.s32 %s10, 1
    %s16 = ssub.s32 %s10, 2
    %s23 = sadd.s32 1, %s18
    %p24 = scmp.ge.s32.totalorder %s23, 1
    %s25 = scalar_select %p24, 0, %s23
    %s26 = sadd.s32 1, %s17
    %s27 = scalar_select %p24, %s26, %s17
    %p28 = scmp.ge.s32.totalorder %s27, 2
    %s29 = scalar_select %p28, 0, %s27
    %s30 = ssub.s32 %s17, %s29
    %s31 = ssub.s32 %s18, %s25
    %s32 = sor.u32 %s30, %s31
    %p33 = scmp.eq.s32.totalorder %s32, 0
    %s35 = sadd.s32 %s34, 1
    %s36 = scalar_select %p33, %s34, %s35
    %p39 = pneg %p33
    %p40 = scmp.eq.s32.totalorder %s10, 1
    %p41 = por %p39, %p40
    %p42 = scmp.ne.s32.totalorder %s34, %s37
    %p43 = scmp.eq.s32.totalorder %s10, 0
    %p44 = por %p42, %p43
    %p45 = scmp.ne.s32.totalorder %s34, %s37
    %p46 = scmp.eq.s32.totalorder %s15, 1
    %p47 = por %p45, %p46
    %p48 = scmp.ne.s32.totalorder %s37, %s38
    %p49 = scmp.eq.s32.totalorder %s15, 0
    %p50 = por %p48, %p49
    %p51 = scmp.ne.s32.totalorder %s37, %s38
    %p52 = scmp.eq.s32.totalorder %s16, 1
    %p53 = por %p51, %p52
    %p55 = scmp.ne.s32.totalorder %s38, %s54
    %p56 = scmp.eq.s32.totalorder %s16, 0
    %p57 = por %p55, %p56
    %s58 = sadd.s32 %s18, 1
    %s59 = smul.u32 %s58, 8
    %s60 = sadd.s32 %s25, 1
    %s61 = smul.u32 %s60, 8
    %s62 = ssub.s32 %s17, %s29
    %s63 = ssub.s32 %s59, %s61
    %s64 = sor.u32 %s62, %s63
    %p65 = scmp.eq.s32.totalorder %s64, 0
    %s67 = sadd.s32 %s66, 1
    %s68 = scalar_select %p65, %s66, %s67
    %p71 = pneg %p65
    %p72 = scmp.eq.s32.totalorder %s10, 1
    %p73 = por %p71, %p72
    %p74 = scmp.ne.s32.totalorder %s66, %s69
    %p75 = scmp.eq.s32.totalorder %s10, 0
    %p76 = por %p74, %p75
    %p77 = scmp.ne.s32.totalorder %s66, %s69
    %p78 = scmp.eq.s32.totalorder %s15, 1
    %p79 = por %p77, %p78
    %p80 = scmp.ne.s32.totalorder %s69, %s70
    %p81 = scmp.eq.s32.totalorder %s15, 0
    %p82 = por %p80, %p81
    %p83 = scmp.ne.s32.totalorder %s69, %s70
    %p84 = scmp.eq.s32.totalorder %s16, 1
    %p85 = por %p83, %p84
    %p87 = scmp.ne.s32.totalorder %s70, %s86
    %p88 = scmp.eq.s32.totalorder %s16, 0
    %p89 = por %p87, %p88
    %s91 = sadd.s32 %s90, 1
    %p94 = scmp.eq.s32.totalorder %s10, 1
    %p95 = scmp.ne.s32.totalorder %s90, %s92
    %p96 = scmp.eq.s32.totalorder %s10, 0
    %p97 = por %p95, %p96
    %p98 = scmp.ne.s32.totalorder %s90, %s92
    %p99 = scmp.eq.s32.totalorder %s15, 1
    %p100 = por %p98, %p99
    %p101 = scmp.ne.s32.totalorder %s92, %s93
    %p102 = scmp.eq.s32.totalorder %s15, 0
    %p103 = por %p101, %p102
    %p104 = scmp.ne.s32.totalorder %s92, %s93
    %p105 = scmp.eq.s32.totalorder %s16, 1
    %p106 = por %p104, %p105
    %p108 = scmp.ne.s32.totalorder %s93, %s107
    %p109 = scmp.eq.s32.totalorder %s16, 0
    %p110 = por %p108, %p109
    %s112 = sadd.s32 %s111, 1
    %p115 = scmp.eq.s32.totalorder %s10, 1
    %p116 = scmp.ne.s32.totalorder %s111, %s113
    %p117 = scmp.eq.s32.totalorder %s10, 0
    %p118 = por %p116, %p117
    %p119 = scmp.ne.s32.totalorder %s111, %s113
    %p120 = scmp.eq.s32.totalorder %s15, 1
    %p121 = por %p119, %p120
    %p122 = scmp.ne.s32.totalorder %s113, %s114
    %p123 = scmp.eq.s32.totalorder %s15, 0
    %p124 = por %p122, %p123
    %p125 = scmp.ne.s32.totalorder %s113, %s114
    %p126 = scmp.eq.s32.totalorder %s16, 1
    %p127 = por %p125, %p126
    %p129 = scmp.ne.s32.totalorder %s114, %s128
    %p130 = scmp.eq.s32.totalorder %s16, 0
    %p131 = por %p129, %p130
    %s132 = ssub.s32 %s17, %s29
    %s133 = ssub.s32 %s18, %s25
    %s134 = sor.u32 %s132, %s133
    %p135 = scmp.eq.s32.totalorder %s134, 0
    %s137 = sadd.s32 %s136, 1
    %s138 = scalar_select %p135, %s136, %s137
    %p141 = pneg %p135
    %p142 = scmp.eq.s32.totalorder %s10, 1
    %p143 = por %p141, %p142
    %p144 = scmp.ne.s32.totalorder %s136, %s139
    %p145 = scmp.eq.s32.totalorder %s10, 0
    %p146 = por %p144, %p145
    %p147 = scmp.ne.s32.totalorder %s136, %s139
    %p148 = scmp.eq.s32.totalorder %s15, 1
    %p149 = por %p147, %p148
    %p150 = scmp.ne.s32.totalorder %s139, %s140
    %p151 = scmp.eq.s32.totalorder %s15, 0
    %p152 = por %p150, %p151
    %p153 = scmp.ne.s32.totalorder %s139, %s140
    %p154 = scmp.eq.s32.totalorder %s16, 1
    %p155 = por %p153, %p154
    %p157 = scmp.ne.s32.totalorder %s140, %s156
    %p158 = scmp.eq.s32.totalorder %s16, 0
    %p159 = por %p157, %p158
    %p160 = scmp.le.s32.totalorder 1, %s10
    %p161 = scmp.lt.s32.totalorder %s10, 3
    %p162 = pnand %p160, %p161
    %p163 = pneg %p162
    // Predicated region
    $region9: #{tpu_custom_call.1} parent=5 // pred_check
      _
    $region10: #{tpu_custom_call.1} parent=5 // pred_check_branch
      %165 = sbr.rel (%p162) target = $region12
    $region11: #{tpu_custom_call.1} parent=5 // pred_region
      %s166 = ssub.s32 %s10, 1
      // Predicated region
      $region13: #{tpu_custom_call.1} parent=11 // pred_check
        %p167 = pneg %p103
      $region14: #{tpu_custom_call.1} parent=11 // pred_check_branch
        %169 = sbr.rel (%p167) target = $region16
      $region15: #{tpu_custom_call.1} parent=11 // pred_region
        _
      $region16: #{tpu_custom_call.1} parent=11 // pred_fallthru
        _
      // Predicated region
      $region17: #{tpu_custom_call.1} parent=11 // pred_check
        %p170 = pneg %p124
      $region18: #{tpu_custom_call.1} parent=11 // pred_check_branch
        %172 = sbr.rel (%p170) target = $region20
      $region19: #{tpu_custom_call.1} parent=11 // pred_region
        _
      $region20: #{tpu_custom_call.1} parent=11 // pred_fallthru
        _
    $region12: #{tpu_custom_call.1} parent=5 // pred_fallthru
      _
    %p173 = scmp.lt.s32.totalorder %s10, 2
    // Predicated region
    $region21: #{tpu_custom_call.1} parent=5 // pred_check
      %p174 = pneg %p173
    $region22: #{tpu_custom_call.1} parent=5 // pred_check_branch
      %176 = sbr.rel (%p174) target = $region24
    $region23: #{tpu_custom_call.1} parent=5 // pred_region
      // Predicated region
      $region25: #{tpu_custom_call.1} parent=23 // pred_check
        %p177 = pneg %p44
      $region26: #{tpu_custom_call.1} parent=23 // pred_check_branch
        %179 = sbr.rel (%p177) target = $region28
      $region27: #{tpu_custom_call.1} parent=23 // pred_region
        %s180 = smul.u32 16, %s18
        %s181 = ssub.s32 18, %s180
        %p182 = scmp.lt.s32.totalorder %s181, 16
        %s183 = scalar_select %p182, %s181, 16
        %s184 = smul.u32 64, %s183
        %s185 = smul.u32 %s184, 3
        %p186 = scmp.lt.s32.totalorder %s17, 1
        %s187 = scalar_select %p186, %s17, 1
        %p188 = scmp.lt.s32.totalorder %s180, 17
        %s189 = scalar_select %p188, %s180, 17
        %s190 = smul.addr %s189, 3
        %s191 = smul.addr %s187, 54
        %s192 = sadd.s32 %s190, %s191
        %s193 = smul.addr %s192, 4
        %s194 = scalar_lea.vmem %s0, %s193
        %s195 = smul.u32 16, %s18
        %s196 = ssub.s32 18, %s195
        %p197 = scmp.lt.s32.totalorder %s196, 16
        %s198 = scalar_select %p197, %s196, 16
        %s199 = smul.u32 64, %s198
        %s200 = smul.u32 %s199, 3
      $region28: #{tpu_custom_call.1} parent=23 // pred_fallthru
        _
      // Predicated region
      $region29: #{tpu_custom_call.1} parent=23 // pred_check
        %p201 = pneg %p76
      $region30: #{tpu_custom_call.1} parent=23 // pred_check_branch
        %203 = sbr.rel (%p201) target = $region32
      $region31: #{tpu_custom_call.1} parent=23 // pred_region
        %s204 = sadd.s32 %s18, 1
        %s205 = smul.u32 %s204, 8
        %s206 = smul.u32 2, %s205
        %p207 = scmp.lt.s32.totalorder %s17, 1
        %s208 = scalar_select %p207, %s17, 1
        %p209 = scmp.lt.s32.totalorder %s206, 17
        %s210 = scalar_select %p209, %s206, 17
        %s211 = smul.addr %s210, 3
        %s212 = smul.addr %s208, 54
        %s213 = sadd.s32 %s211, %s212
        %s214 = smul.addr %s213, 4
        %s215 = scalar_lea.vmem %s1, %s214
        %s216 = sadd.s32 %s18, 1
        %s217 = smul.u32 %s216, 8
        %s218 = smul.u32 2, %s217
      $region32: #{tpu_custom_call.1} parent=23 // pred_fallthru
        _
    $region24: #{tpu_custom_call.1} parent=5 // pred_fallthru
      _
    %p219 = scmp.le.s32.totalorder 1, %s10
    %p220 = scmp.lt.s32.totalorder %s10, 3
    %p221 = pnand %p219, %p220
    %p222 = pneg %p221
    // Predicated region
    $region33: #{tpu_custom_call.1} parent=5 // pred_check
      _
    $region34: #{tpu_custom_call.1} parent=5 // pred_check_branch
      %224 = sbr.rel (%p221) target = $region36
    $region35: #{tpu_custom_call.1} parent=5 // pred_region
      %s225 = ssub.s32 %s10, 1
      %s226 = smul.u32 16, %s20
      %s227 = ssub.s32 18, %s226
      %p228 = scmp.lt.s32.totalorder %s227, 16
      %s229 = scalar_select %p228, %s227, 16
      %s230 = smul.u32 64, %s229
      %s231 = smul.u32 %s230, 3
      %p232 = scmp.lt.s32.totalorder %s19, 1
      %s233 = scalar_select %p232, %s19, 1
      %p234 = scmp.lt.s32.totalorder %s226, 17
      %s235 = scalar_select %p234, %s226, 17
      %s236 = smul.addr %s235, 3
      %s237 = smul.addr %s233, 54
      %s238 = sadd.s32 %s236, %s237
      %s239 = smul.addr %s238, 4
      %s240 = scalar_lea.vmem %s0, %s239
      %p241 = pneg %p50
      %p242 = pneg %p47
      %s243 = sadd.s32 %s20, 1
      %s244 = smul.u32 %s243, 8
      %s245 = smul.u32 2, %s244
      %p246 = scmp.lt.s32.totalorder %s19, 1
      %s247 = scalar_select %p246, %s19, 1
      %p248 = scmp.lt.s32.totalorder %s245, 17
      %s249 = scalar_select %p248, %s245, 17
      %s250 = smul.addr %s249, 3
      %s251 = smul.addr %s247, 54
      %s252 = sadd.s32 %s250, %s251
      %s253 = smul.addr %s252, 4
      %s254 = scalar_lea.vmem %s1, %s253
      %p255 = pneg %p82
      %p256 = pneg %p79
      %p257 = pneg %p103
      %p258 = pneg %p100
      %p259 = pneg %p124
      %p260 = pneg %p121
      %p261 = pneg %p152
      %p262 = pneg %p149
      %s263 = smul.u32 16, %s20
      %p264 = scmp.lt.s32.totalorder %s19, 1
      %s265 = scalar_select %p264, %s19, 1
      %p266 = scmp.lt.s32.totalorder %s263, 15
      %s267 = scalar_select %p266, %s263, 15
      %s268 = smul.addr %s267, 2
      %s269 = smul.addr %s265, 32
      %s270 = sadd.s32 %s268, %s269
      %s271 = smul.addr %s270, 8
      %s272 = scalar_lea.vmem %s4, %s271
      %s273 = smul.u32 16, %s20
      %s274 = ssub.s32 18, %s273
      %p275 = scmp.lt.s32.totalorder %s274, 16
      %s276 = scalar_select %p275, %s274, 16
      %s277 = smul.u32 64, %s276
      %s278 = smul.u32 %s277, 3
      %p279 = scmp.lt.s32.totalorder %s19, 1
      %s280 = scalar_select %p279, %s19, 1
      %p281 = scmp.lt.s32.totalorder %s273, 17
      %s282 = scalar_select %p281, %s273, 17
      %s283 = smul.addr %s282, 3
      %s284 = smul.addr %s280, 54
      %s285 = sadd.s32 %s283, %s284
      %s286 = smul.addr %s285, 4
      %s287 = scalar_lea.vmem %s0, %s286
      %s288 = smul.u32 16, %s20
      %s289 = ssub.s32 18, %s288
      %p290 = scmp.lt.s32.totalorder %s289, 16
      %s291 = scalar_select %p290, %s289, 16
      %s292 = smul.u32 64, %s291
      %s293 = smul.u32 %s292, 3
      %s294 = sadd.s32 %s20, 1
      %s295 = smul.u32 %s294, 8
      %s296 = smul.u32 2, %s295
      %p297 = scmp.lt.s32.totalorder %s19, 1
      %s298 = scalar_select %p297, %s19, 1
      %p299 = scmp.lt.s32.totalorder %s296, 17
      %s300 = scalar_select %p299, %s296, 17
      %s301 = smul.addr %s300, 3
      %s302 = smul.addr %s298, 54
      %s303 = sadd.s32 %s301, %s302
      %s304 = smul.addr %s303, 4
      %s305 = scalar_lea.vmem %s1, %s304
      %s306 = sadd.s32 %s20, 1
      %s307 = smul.u32 %s306, 8
      %s308 = smul.u32 2, %s307
      %s309 = smul.u32 16, %s20
      %p310 = scmp.lt.s32.totalorder %s19, 1
      %s311 = scalar_select %p310, %s19, 1
      %p312 = scmp.lt.s32.totalorder %s309, 15
      %s313 = scalar_select %p312, %s309, 15
      %s314 = smul.addr %s313, 2
      %s315 = smul.addr %s311, 32
      %s316 = sadd.s32 %s314, %s315
      %s317 = smul.addr %s316, 8
      %s318 = scalar_lea.vmem %s4, %s317
      %s319 = smul.u32 16, %s20
      %v321 = vld [vmem:[%s287] sm:$0xf]
      %v322 = vld [vmem:[%s287 + $0x4] sm:$0xf]
      %v323 = vld [vmem:[%s287 + $0x8] sm:$0x1]
      %v324 = vld [vmem:[%s287 + $0xc] sm:$0xf]
      %v325 = vld [vmem:[%s287 + $0x10] sm:$0xf]
      %v326 = vld [vmem:[%s287 + $0x14] sm:$0x1]
      %v327 = vld [vmem:[%s287 + $0x18] sm:$0xf]
      %v328 = vld [vmem:[%s287 + $0x1c] sm:$0xf]
      %v329 = vld [vmem:[%s287 + $0x20] sm:$0x1]
      %v330 = vld [vmem:[%s287 + $0x24] sm:$0xf]
      %v331 = vld [vmem:[%s287 + $0x28] sm:$0xf]
      %v332 = vld [vmem:[%s287 + $0x2c] sm:$0x1]
      %v333 = vld [vmem:[%s287 + $0x30] sm:$0xf]
      %v334 = vld [vmem:[%s287 + $0x34] sm:$0xf]
      %v335 = vld [vmem:[%s287 + $0x38] sm:$0x1]
      %v336 = vld [vmem:[%s287 + $0x3c] sm:$0xf]
      %v337 = vld [vmem:[%s287 + $0x40] sm:$0xf]
      %v338 = vld [vmem:[%s287 + $0x44] sm:$0x1]
      %v339 = vld [vmem:[%s287 + $0x48] sm:$0xf]
      %v340 = vld [vmem:[%s287 + $0x4c] sm:$0xf]
      %v341 = vld [vmem:[%s287 + $0x50] sm:$0x1]
      %v342 = vld [vmem:[%s287 + $0x54] sm:$0xf]
      %v343 = vld [vmem:[%s287 + $0x58] sm:$0xf]
      %v344 = vld [vmem:[%s287 + $0x5c] sm:$0x1]
      %v345 = vld [vmem:[%s287 + $0x60] sm:$0xf]
      %v346 = vld [vmem:[%s287 + $0x64] sm:$0xf]
      %v347 = vld [vmem:[%s287 + $0x68] sm:$0x1]
      %v348 = vld [vmem:[%s287 + $0x6c] sm:$0xf]
      %v349 = vld [vmem:[%s287 + $0x70] sm:$0xf]
      %v350 = vld [vmem:[%s287 + $0x74] sm:$0x1]
      %v351 = vld [vmem:[%s287 + $0x78] sm:$0xf]
      %v352 = vld [vmem:[%s287 + $0x7c] sm:$0xf]
      %v353 = vld [vmem:[%s287 + $0x80] sm:$0x1]
      %v354 = vld [vmem:[%s287 + $0x84] sm:$0xf]
      %v355 = vld [vmem:[%s287 + $0x88] sm:$0xf]
      %v356 = vld [vmem:[%s287 + $0x8c] sm:$0x1]
      %v357 = vld [vmem:[%s287 + $0x90] sm:$0xf]
      %v358 = vld [vmem:[%s287 + $0x94] sm:$0xf]
      %v359 = vld [vmem:[%s287 + $0x98] sm:$0x1]
      %v360 = vld [vmem:[%s287 + $0x9c] sm:$0xf]
      %v361 = vld [vmem:[%s287 + $0xa0] sm:$0xf]
      %v362 = vld [vmem:[%s287 + $0xa4] sm:$0x1]
      %v363 = vld [vmem:[%s287 + $0xa8] sm:$0xf]
      %v364 = vld [vmem:[%s287 + $0xac] sm:$0xf]
      %v365 = vld [vmem:[%s287 + $0xb0] sm:$0x1]
      %v366 = vld [vmem:[%s287 + $0xb4] sm:$0xf]
      %v367 = vld [vmem:[%s287 + $0xb8] sm:$0xf]
      %v368 = vld [vmem:[%s287 + $0xbc] sm:$0x1]
      %v369 = vld [vmem:[%s305] sm:$0xf]
      %v370 = vld [vmem:[%s305 + $0x4] sm:$0xf]
      %v371 = vld [vmem:[%s305 + $0x8] sm:$0x1]
      %v372 = vld [vmem:[%s305 + $0xc] sm:$0xf]
      %v373 = vld [vmem:[%s305 + $0x10] sm:$0xf]
      %v374 = vld [vmem:[%s305 + $0x14] sm:$0x1]
      %v411 = vunpack.c.l.b16 %v321
      %v412 = vunpack.c.l.b16 %v322
      %v413 = vunpack.c.l.b16 %v324
      %v414 = vunpack.c.l.b16 %v325
      %v415 = vunpack.c.l.b16 %v327
      %v416 = vunpack.c.l.b16 %v328
      %v417 = vunpack.c.l.b16 %v330
      %v418 = vunpack.c.l.b16 %v331
      %v419 = vunpack.c.l.b16 %v333
      %v420 = vunpack.c.l.b16 %v334
      %v421 = vunpack.c.l.b16 %v336
      %v422 = vunpack.c.l.b16 %v337
      %v423 = vunpack.c.l.b16 %v339
      %v424 = vunpack.c.l.b16 %v340
      %v425 = vunpack.c.l.b16 %v342
      %v426 = vunpack.c.l.b16 %v343
      %v427 = vunpack.c.l.b16 %v345
      %v428 = vunpack.c.l.b16 %v346
      %v429 = vunpack.c.l.b16 %v348
      %v430 = vunpack.c.l.b16 %v349
      %v431 = vunpack.c.l.b16 %v351
      %v432 = vunpack.c.l.b16 %v352
      %v433 = vunpack.c.l.b16 %v354
      %v434 = vunpack.c.l.b16 %v355
      %v435 = vunpack.c.l.b16 %v357
      %v436 = vunpack.c.l.b16 %v358
      %v437 = vunpack.c.l.b16 %v360
      %v438 = vunpack.c.l.b16 %v361
      %v439 = vunpack.c.l.b16 %v363
      %v440 = vunpack.c.l.b16 %v364
      %v441 = vunpack.c.l.b16 %v366
      %v442 = vunpack.c.l.b16 %v367
      %v443 = vunpack.c.l.b16 %v369
      %v444 = vunpack.c.l.b16 %v370
      %v445 = vunpack.c.l.b16 %v372
      %v446 = vunpack.c.l.b16 %v373
      %v447 = vpack.c.b16 %v412, %v411
      %v448 = vpack.c.b16 %v414, %v413
      %v449 = vpack.c.b16 %v416, %v415
      %v450 = vpack.c.b16 %v418, %v417
      %v451 = vpack.c.b16 %v420, %v419
      %v452 = vpack.c.b16 %v422, %v421
      %v453 = vpack.c.b16 %v424, %v423
      %v454 = vpack.c.b16 %v426, %v425
      %v455 = vpack.c.b16 %v428, %v427
      %v456 = vpack.c.b16 %v430, %v429
      %v457 = vpack.c.b16 %v432, %v431
      %v458 = vpack.c.b16 %v434, %v433
      %v459 = vpack.c.b16 %v436, %v435
      %v460 = vpack.c.b16 %v438, %v437
      %v461 = vpack.c.b16 %v440, %v439
      %v462 = vpack.c.b16 %v442, %v441
      %v463 = vpack.c.b16 %v444, %v443
      %v464 = vpack.c.b16 %v446, %v445
      %v483 = vunpack.c.l.b16 %v323
      %v484 = vunpack.c.l.b16 %v326
      %v485 = vunpack.c.l.b16 %v329
      %v486 = vunpack.c.l.b16 %v332
      %v487 = vunpack.c.l.b16 %v335
      %v488 = vunpack.c.l.b16 %v338
      %v489 = vunpack.c.l.b16 %v341
      %v490 = vunpack.c.l.b16 %v344
      %v491 = vunpack.c.l.b16 %v347
      %v492 = vunpack.c.l.b16 %v350
      %v493 = vunpack.c.l.b16 %v353
      %v494 = vunpack.c.l.b16 %v356
      %v495 = vunpack.c.l.b16 %v359
      %v496 = vunpack.c.l.b16 %v362
      %v497 = vunpack.c.l.b16 %v365
      %v498 = vunpack.c.l.b16 %v368
      %v499 = vunpack.c.l.b16 %v371
      %v500 = vunpack.c.l.b16 %v374
      %v501 = vpack.c.b16 %v483, %v483
      %v502 = vpack.c.b16 %v484, %v484
      %v503 = vpack.c.b16 %v485, %v485
      %v504 = vpack.c.b16 %v486, %v486
      %v505 = vpack.c.b16 %v487, %v487
      %v506 = vpack.c.b16 %v488, %v488
      %v507 = vpack.c.b16 %v489, %v489
      %v508 = vpack.c.b16 %v490, %v490
      %v509 = vpack.c.b16 %v491, %v491
      %v510 = vpack.c.b16 %v492, %v492
      %v511 = vpack.c.b16 %v493, %v493
      %v512 = vpack.c.b16 %v494, %v494
      %v513 = vpack.c.b16 %v495, %v495
      %v514 = vpack.c.b16 %v496, %v496
      %v515 = vpack.c.b16 %v497, %v497
      %v516 = vpack.c.b16 %v498, %v498
      %v517 = vpack.c.b16 %v499, %v499
      %v518 = vpack.c.b16 %v500, %v500
      %vm519 = vsmask.f32 7424
      %v521 = vshrl.u32 %v447, 16
      %v523 = vshll.u32 %v447, 16
      %v525 = vrot.slane %v523, 1
      %v526 = vor.u32 %v521, %v525
      %v528 = vshll.u32 %v501, 16
      %v530 = vrot.slane %v528, 1
      %v531 = vsel %vm519, %v526, %v530
      %v533 = vshrl.u32 %v448, 16
      %v535 = vshll.u32 %v448, 16
      %v537 = vrot.slane %v535, 1
      %v538 = vor.u32 %v533, %v537
      %v540 = vshll.u32 %v502, 16
      %v542 = vrot.slane %v540, 1
      %v543 = vsel %vm519, %v538, %v542
      %v545 = vshrl.u32 %v449, 16
      %v547 = vshll.u32 %v449, 16
      %v549 = vrot.slane %v547, 1
      %v550 = vor.u32 %v545, %v549
      %v552 = vshll.u32 %v503, 16
      %v554 = vrot.slane %v552, 1
      %v555 = vsel %vm519, %v550, %v554
      %v557 = vshrl.u32 %v450, 16
      %v559 = vshll.u32 %v450, 16
      %v561 = vrot.slane %v559, 1
      %v562 = vor.u32 %v557, %v561
      %v564 = vshll.u32 %v504, 16
      %v566 = vrot.slane %v564, 1
      %v567 = vsel %vm519, %v562, %v566
      %v569 = vshrl.u32 %v451, 16
      %v571 = vshll.u32 %v451, 16
      %v573 = vrot.slane %v571, 1
      %v574 = vor.u32 %v569, %v573
      %v576 = vshll.u32 %v505, 16
      %v578 = vrot.slane %v576, 1
      %v579 = vsel %vm519, %v574, %v578
      %v581 = vshrl.u32 %v452, 16
      %v583 = vshll.u32 %v452, 16
      %v585 = vrot.slane %v583, 1
      %v586 = vor.u32 %v581, %v585
      %v588 = vshll.u32 %v506, 16
      %v590 = vrot.slane %v588, 1
      %v591 = vsel %vm519, %v586, %v590
      %v593 = vshrl.u32 %v453, 16
      %v595 = vshll.u32 %v453, 16
      %v597 = vrot.slane %v595, 1
      %v598 = vor.u32 %v593, %v597
      %v600 = vshll.u32 %v507, 16
      %v602 = vrot.slane %v600, 1
      %v603 = vsel %vm519, %v598, %v602
      %v605 = vshrl.u32 %v454, 16
      %v607 = vshll.u32 %v454, 16
      %v609 = vrot.slane %v607, 1
      %v610 = vor.u32 %v605, %v609
      %v612 = vshll.u32 %v508, 16
      %v614 = vrot.slane %v612, 1
      %v615 = vsel %vm519, %v610, %v614
      %v617 = vshrl.u32 %v455, 16
      %v619 = vshll.u32 %v455, 16
      %v621 = vrot.slane %v619, 1
      %v622 = vor.u32 %v617, %v621
      %v624 = vshll.u32 %v509, 16
      %v626 = vrot.slane %v624, 1
      %v627 = vsel %vm519, %v622, %v626
      %v629 = vshrl.u32 %v456, 16
      %v631 = vshll.u32 %v456, 16
      %v633 = vrot.slane %v631, 1
      %v634 = vor.u32 %v629, %v633
      %v636 = vshll.u32 %v510, 16
      %v638 = vrot.slane %v636, 1
      %v639 = vsel %vm519, %v634, %v638
      %v641 = vshrl.u32 %v457, 16
      %v643 = vshll.u32 %v457, 16
      %v645 = vrot.slane %v643, 1
      %v646 = vor.u32 %v641, %v645
      %v648 = vshll.u32 %v511, 16
      %v650 = vrot.slane %v648, 1
      %v651 = vsel %vm519, %v646, %v650
      %v653 = vshrl.u32 %v458, 16
      %v655 = vshll.u32 %v458, 16
      %v657 = vrot.slane %v655, 1
      %v658 = vor.u32 %v653, %v657
      %v660 = vshll.u32 %v512, 16
      %v662 = vrot.slane %v660, 1
      %v663 = vsel %vm519, %v658, %v662
      %v665 = vshrl.u32 %v459, 16
      %v667 = vshll.u32 %v459, 16
      %v669 = vrot.slane %v667, 1
      %v670 = vor.u32 %v665, %v669
      %v672 = vshll.u32 %v513, 16
      %v674 = vrot.slane %v672, 1
      %v675 = vsel %vm519, %v670, %v674
      %v677 = vshrl.u32 %v460, 16
      %v679 = vshll.u32 %v460, 16
      %v681 = vrot.slane %v679, 1
      %v682 = vor.u32 %v677, %v681
      %v684 = vshll.u32 %v514, 16
      %v686 = vrot.slane %v684, 1
      %v687 = vsel %vm519, %v682, %v686
      %v689 = vshrl.u32 %v461, 16
      %v691 = vshll.u32 %v461, 16
      %v693 = vrot.slane %v691, 1
      %v694 = vor.u32 %v689, %v693
      %v696 = vshll.u32 %v515, 16
      %v698 = vrot.slane %v696, 1
      %v699 = vsel %vm519, %v694, %v698
      %v701 = vshrl.u32 %v462, 16
      %v703 = vshll.u32 %v462, 16
      %v705 = vrot.slane %v703, 1
      %v706 = vor.u32 %v701, %v705
      %v708 = vshll.u32 %v516, 16
      %v710 = vrot.slane %v708, 1
      %v711 = vsel %vm519, %v706, %v710
      %v713 = vshrl.u32 %v463, 16
      %v715 = vshll.u32 %v463, 16
      %v717 = vrot.slane %v715, 1
      %v718 = vor.u32 %v713, %v717
      %v720 = vshll.u32 %v517, 16
      %v722 = vrot.slane %v720, 1
      %v723 = vsel %vm519, %v718, %v722
      %v725 = vshrl.u32 %v464, 16
      %v727 = vshll.u32 %v464, 16
      %v729 = vrot.slane %v727, 1
      %v730 = vor.u32 %v725, %v729
      %v732 = vshll.u32 %v518, 16
      %v734 = vrot.slane %v732, 1
      %v735 = vsel %vm519, %v730, %v734
      %736 = vrot.lane.b32.xlu0 %v531, 4
      %v737 = vpop.permute.xlu0 %736
      %738 = vrot.lane.b32.xlu0 %v543, 4
      %v739 = vpop.permute.xlu0 %738
      %740 = vrot.lane.b32.xlu0 %v555, 4
      %v741 = vpop.permute.xlu0 %740
      %742 = vrot.lane.b32.xlu0 %v567, 4
      %v743 = vpop.permute.xlu0 %742
      %744 = vrot.lane.b32.xlu0 %v579, 4
      %v745 = vpop.permute.xlu0 %744
      %746 = vrot.lane.b32.xlu0 %v591, 4
      %v747 = vpop.permute.xlu0 %746
      %748 = vrot.lane.b32.xlu0 %v603, 4
      %v749 = vpop.permute.xlu0 %748
      %750 = vrot.lane.b32.xlu0 %v615, 4
      %v751 = vpop.permute.xlu0 %750
      %752 = vrot.lane.b32.xlu0 %v627, 4
      %v753 = vpop.permute.xlu0 %752
      %754 = vrot.lane.b32.xlu0 %v639, 4
      %v755 = vpop.permute.xlu0 %754
      %756 = vrot.lane.b32.xlu0 %v651, 4
      %v757 = vpop.permute.xlu0 %756
      %758 = vrot.lane.b32.xlu0 %v663, 4
      %v759 = vpop.permute.xlu0 %758
      %760 = vrot.lane.b32.xlu0 %v675, 4
      %v761 = vpop.permute.xlu0 %760
      %762 = vrot.lane.b32.xlu0 %v687, 4
      %v763 = vpop.permute.xlu0 %762
      %764 = vrot.lane.b32.xlu0 %v699, 4
      %v765 = vpop.permute.xlu0 %764
      %766 = vrot.lane.b32.xlu0 %v711, 4
      %v767 = vpop.permute.xlu0 %766
      %768 = vrot.lane.b32.xlu0 %v723, 4
      %v769 = vpop.permute.xlu0 %768
      %770 = vrot.lane.b32.xlu0 %v735, 4
      %v771 = vpop.permute.xlu0 %770
      %vm772 = vcmask 1046528
      %v773 = vrot.slane %v447, 1
      %v774 = vrot.slane %v501, 1
      %v775 = vsel %vm772, %v773, %v774
      %v776 = vrot.slane %v448, 1
      %v777 = vrot.slane %v502, 1
      %v778 = vsel %vm772, %v776, %v777
      %v779 = vrot.slane %v449, 1
      %v780 = vrot.slane %v503, 1
      %v781 = vsel %vm772, %v779, %v780
      %v782 = vrot.slane %v450, 1
      %v783 = vrot.slane %v504, 1
      %v784 = vsel %vm772, %v782, %v783
      %v785 = vrot.slane %v451, 1
      %v786 = vrot.slane %v505, 1
      %v787 = vsel %vm772, %v785, %v786
      %v788 = vrot.slane %v452, 1
      %v789 = vrot.slane %v506, 1
      %v790 = vsel %vm772, %v788, %v789
      %v791 = vrot.slane %v453, 1
      %v792 = vrot.slane %v507, 1
      %v793 = vsel %vm772, %v791, %v792
      %v794 = vrot.slane %v454, 1
      %v795 = vrot.slane %v508, 1
      %v796 = vsel %vm772, %v794, %v795
      %v797 = vrot.slane %v455, 1
      %v798 = vrot.slane %v509, 1
      %v799 = vsel %vm772, %v797, %v798
      %v800 = vrot.slane %v456, 1
      %v801 = vrot.slane %v510, 1
      %v802 = vsel %vm772, %v800, %v801
      %v803 = vrot.slane %v457, 1
      %v804 = vrot.slane %v511, 1
      %v805 = vsel %vm772, %v803, %v804
      %v806 = vrot.slane %v458, 1
      %v807 = vrot.slane %v512, 1
      %v808 = vsel %vm772, %v806, %v807
      %v809 = vrot.slane %v459, 1
      %v810 = vrot.slane %v513, 1
      %v811 = vsel %vm772, %v809, %v810
      %v812 = vrot.slane %v460, 1
      %v813 = vrot.slane %v514, 1
      %v814 = vsel %vm772, %v812, %v813
      %v815 = vrot.slane %v461, 1
      %v816 = vrot.slane %v515, 1
      %v817 = vsel %vm772, %v815, %v816
      %v818 = vrot.slane %v462, 1
      %v819 = vrot.slane %v516, 1
      %v820 = vsel %vm772, %v818, %v819
      %v821 = vrot.slane %v463, 1
      %v822 = vrot.slane %v517, 1
      %v823 = vsel %vm772, %v821, %v822
      %v824 = vrot.slane %v464, 1
      %v825 = vrot.slane %v518, 1
      %v826 = vsel %vm772, %v824, %v825
      %827 = vrot.lane.b32.xlu0 %v775, 8
      %v828 = vpop.permute.xlu0 %827
      %829 = vrot.lane.b32.xlu0 %v778, 8
      %v830 = vpop.permute.xlu0 %829
      %831 = vrot.lane.b32.xlu0 %v781, 8
      %v832 = vpop.permute.xlu0 %831
      %833 = vrot.lane.b32.xlu0 %v784, 8
      %v834 = vpop.permute.xlu0 %833
      %835 = vrot.lane.b32.xlu0 %v787, 8
      %v836 = vpop.permute.xlu0 %835
      %837 = vrot.lane.b32.xlu0 %v790, 8
      %v838 = vpop.permute.xlu0 %837
      %839 = vrot.lane.b32.xlu0 %v793, 8
      %v840 = vpop.permute.xlu0 %839
      %841 = vrot.lane.b32.xlu0 %v796, 8
      %v842 = vpop.permute.xlu0 %841
      %843 = vrot.lane.b32.xlu0 %v799, 8
      %v844 = vpop.permute.xlu0 %843
      %845 = vrot.lane.b32.xlu0 %v802, 8
      %v846 = vpop.permute.xlu0 %845
      %847 = vrot.lane.b32.xlu0 %v805, 8
      %v848 = vpop.permute.xlu0 %847
      %849 = vrot.lane.b32.xlu0 %v808, 8
      %v850 = vpop.permute.xlu0 %849
      %851 = vrot.lane.b32.xlu0 %v811, 8
      %v852 = vpop.permute.xlu0 %851
      %853 = vrot.lane.b32.xlu0 %v814, 8
      %v854 = vpop.permute.xlu0 %853
      %855 = vrot.lane.b32.xlu0 %v817, 8
      %v856 = vpop.permute.xlu0 %855
      %857 = vrot.lane.b32.xlu0 %v820, 8
      %v858 = vpop.permute.xlu0 %857
      %859 = vrot.lane.b32.xlu0 %v823, 8
      %v860 = vpop.permute.xlu0 %859
      %861 = vrot.lane.b32.xlu0 %v826, 8
      %v862 = vpop.permute.xlu0 %861
      %vm863 = vcmask 31744
      %v865 = vsel %vm863, %v447, %v737
      %v867 = vsel %vm863, %v448, %v739
      %v869 = vsel %vm863, %v449, %v741
      %v871 = vsel %vm863, %v450, %v743
      %v873 = vsel %vm863, %v451, %v745
      %v875 = vsel %vm863, %v452, %v747
      %v877 = vsel %vm863, %v453, %v749
      %v879 = vsel %vm863, %v454, %v751
      %v881 = vsel %vm863, %v455, %v753
      %v883 = vsel %vm863, %v456, %v755
      %v885 = vsel %vm863, %v457, %v757
      %v887 = vsel %vm863, %v458, %v759
      %v889 = vsel %vm863, %v459, %v761
      %v891 = vsel %vm863, %v460, %v763
      %v893 = vsel %vm863, %v461, %v765
      %v895 = vsel %vm863, %v462, %v767
      %v897 = vsel %vm863, %v463, %v769
      %v899 = vsel %vm863, %v464, %v771
      %vm900 = vcmask 64512
      %v902 = vsel %vm900, %v865, %v828
      %v904 = vsel %vm900, %v867, %v830
      %v906 = vsel %vm900, %v869, %v832
      %v908 = vsel %vm900, %v871, %v834
      %v910 = vsel %vm900, %v873, %v836
      %v912 = vsel %vm900, %v875, %v838
      %v914 = vsel %vm900, %v877, %v840
      %v916 = vsel %vm900, %v879, %v842
      %v918 = vsel %vm900, %v881, %v844
      %v920 = vsel %vm900, %v883, %v846
      %v922 = vsel %vm900, %v885, %v848
      %v924 = vsel %vm900, %v887, %v850
      %v926 = vsel %vm900, %v889, %v852
      %v928 = vsel %vm900, %v891, %v854
      %v930 = vsel %vm900, %v893, %v856
      %v932 = vsel %vm900, %v895, %v858
      %v934 = vsel %vm900, %v897, %v860
      %v936 = vsel %vm900, %v899, %v862
      %v937 = vld [vmem:[%s2] sm:$0xf]
      %v938 = vld [vmem:[%s2 + $0x4] sm:$0x3]
      %s939 = scalar_lea.vmem %s2, 8
      %v940 = vld [vmem:[%s939] sm:$0xf]
      %v941 = vld [vmem:[%s939 + $0x4] sm:$0x3]
      %v944 = vunpack.c.l.b16 %v940
      %v945 = vunpack.c.l.b16 %v941
      %v946 = vpack.c.b16 %v945, %v944
      %vm947 = vcmask 97280
      %v948 = vsel %vm947, %v904, 0
      %v950 = vsel %vm947, %v906, 0
      %v952 = vsel %vm947, %v908, 0
      %v954 = vsel %vm947, %v910, 0
      %v956 = vsel %vm947, %v912, 0
      %v958 = vsel %vm947, %v914, 0
      %v960 = vsel %vm947, %v916, 0
      %v962 = vsel %vm947, %v918, 0
      %v964 = vsel %vm947, %v920, 0
      %v966 = vsel %vm947, %v922, 0
      %v968 = vsel %vm947, %v924, 0
      %v970 = vsel %vm947, %v926, 0
      %v972 = vsel %vm947, %v928, 0
      %v974 = vsel %vm947, %v930, 0
      %v976 = vsel %vm947, %v932, 0
      %v978 = vsel %vm947, %v934, 0
      %vm980 = vcmask 1045504
      %v982 = vsel %vm980, %v946, 0
      %984 = vmatprep.subr.bf16.mxu0 0
      %985 = vmatpush1.bf16.msra.mxu0 %v982
      %986 = vmatprep.subr.bf16.mxu0 0
      %987 = vmatpush1.bf16.msra.mxu0 0
      %988 = vmatprep.subr.bf16.mxu0 0
      %989 = vmatpush1.bf16.msra.mxu0 0
      %990 = vmatprep.subr.bf16.mxu0 0
      %991 = vmatpush1.bf16.msra.mxu0 0
      %992 = vmatprep.subr.bf16.mxu0 0
      %993 = vmatpush1.bf16.msra.mxu0 0
      %994 = vmatprep.subr.bf16.mxu0 0
      %995 = vmatpush1.bf16.msra.mxu0 0
      %996 = vmatprep.subr.bf16.mxu0 0
      %997 = vmatpush1.bf16.msra.mxu0 0
      %998 = vmatprep.subr.bf16.mxu0 0
      %999 = vmatpush1.bf16.msra.mxu0 0
      %1000 = vmatprep.subr.bf16.mxu0 0
      %1001 = vmatpush1.bf16.msra.mxu0 0
      %1002 = vmatprep.subr.bf16.mxu0 0
      %1003 = vmatpush1.bf16.msra.mxu0 0
      %1004 = vmatprep.subr.bf16.mxu0 0
      %1005 = vmatpush1.bf16.msra.mxu0 0
      %1006 = vmatprep.subr.bf16.mxu0 0
      %1007 = vmatpush1.bf16.msra.mxu0 0
      %1008 = vmatprep.subr.bf16.mxu0 0
      %1009 = vmatpush1.bf16.msra.mxu0 0
      %1010 = vmatprep.subr.bf16.mxu0 0
      %1011 = vmatpush1.bf16.msra.mxu0 0
      %1012 = vmatprep.subr.bf16.mxu0 0
      %1013 = vmatpush1.bf16.msra.mxu0 0
      %1014 = vmatprep.subr.bf16.mxu0 0
      %1015 = vmatpush1.bf16.msra.mxu0 0
      %1016 = vmatprep.mubr.bf16.mxu0 0
      %1017 = vmatmul.mubr.bf16.gmra.mrb[0].mxu0 %v948
      %v1018 = vpop.f32.mrb[0].mxu0
      %v1019 = vadd.f32 0.0, %v1018
      %v1020 = vpop.f32.mrb[0].mxu0
      %v1021 = vpop.f32.mrb[0].mxu0
      %v1022 = vadd.f32 0.0, %v1021
      %v1023 = vpop.f32.mrb[0].mxu0
      %1024 = vmatprep.mubr.bf16.mxu0 0
      %1025 = vmatmul.mubr.bf16.gmra.mrb[0].mxu0 %v950
      %v1026 = vpop.f32.mrb[0].mxu0
      %v1027 = vadd.f32 0.0, %v1026
      %v1028 = vpop.f32.mrb[0].mxu0
      %v1029 = vpop.f32.mrb[0].mxu0
      %v1030 = vadd.f32 0.0, %v1029
      %v1031 = vpop.f32.mrb[0].mxu0
      %1032 = vmatprep.mubr.bf16.mxu0 0
      %1033 = vmatmul.mubr.bf16.gmra.mrb[0].mxu0 %v952
      %v1034 = vpop.f32.mrb[0].mxu0
      %v1035 = vadd.f32 0.0, %v1034
      %v1036 = vpop.f32.mrb[0].mxu0
      %v1037 = vpop.f32.mrb[0].mxu0
      %v1038 = vadd.f32 0.0, %v1037
      %v1039 = vpop.f32.mrb[0].mxu0
      %1040 = vmatprep.mubr.bf16.mxu0 0
      %1041 = vmatmul.mubr.bf16.gmra.mrb[0].mxu0 %v954
      %v1042 = vpop.f32.mrb[0].mxu0
      %v1043 = vadd.f32 0.0, %v1042
      %v1044 = vpop.f32.mrb[0].mxu0
      %v1045 = vpop.f32.mrb[0].mxu0
      %v1046 = vadd.f32 0.0, %v1045
      %v1047 = vpop.f32.mrb[0].mxu0
      %1048 = vmatprep.mubr.bf16.mxu0 0
      %1049 = vmatmul.mubr.bf16.gmra.mrb[0].mxu0 %v956
      %v1050 = vpop.f32.mrb[0].mxu0
      %v1051 = vadd.f32 0.0, %v1050
      %v1052 = vpop.f32.mrb[0].mxu0
      %v1053 = vpop.f32.mrb[0].mxu0
      %v1054 = vadd.f32 0.0, %v1053
      %v1055 = vpop.f32.mrb[0].mxu0
      %1056 = vmatprep.mubr.bf16.mxu0 0
      %1057 = vmatmul.mubr.bf16.gmra.mrb[0].mxu0 %v958
      %v1058 = vpop.f32.mrb[0].mxu0
      %v1059 = vadd.f32 0.0, %v1058
      %v1060 = vpop.f32.mrb[0].mxu0
      %v1061 = vpop.f32.mrb[0].mxu0
      %v1062 = vadd.f32 0.0, %v1061
      %v1063 = vpop.f32.mrb[0].mxu0
      %1064 = vmatprep.mubr.bf16.mxu0 0
      %1065 = vmatmul.mubr.bf16.gmra.mrb[0].mxu0 %v960
      %v1066 = vpop.f32.mrb[0].mxu0
      %v1067 = vadd.f32 0.0, %v1066
      %v1068 = vpop.f32.mrb[0].mxu0
      %v1069 = vpop.f32.mrb[0].mxu0
      %v1070 = vadd.f32 0.0, %v1069
      %v1071 = vpop.f32.mrb[0].mxu0
      %1072 = vmatprep.mubr.bf16.mxu0 0
      %1073 = vmatmul.mubr.bf16.gmra.mrb[0].mxu0 %v962
      %v1074 = vpop.f32.mrb[0].mxu0
      %v1075 = vadd.f32 0.0, %v1074
      %v1076 = vpop.f32.mrb[0].mxu0
      %v1077 = vpop.f32.mrb[0].mxu0
      %v1078 = vadd.f32 0.0, %v1077
      %v1079 = vpop.f32.mrb[0].mxu0
      %1080 = vmatprep.mubr.bf16.mxu0 0
      %1081 = vmatmul.mubr.bf16.gmra.mrb[0].mxu0 %v964
      %v1082 = vpop.f32.mrb[0].mxu0
      %v1083 = vadd.f32 0.0, %v1082
      %v1084 = vpop.f32.mrb[0].mxu0
      %v1085 = vpop.f32.mrb[0].mxu0
      %v1086 = vadd.f32 0.0, %v1085
      %v1087 = vpop.f32.mrb[0].mxu0
      %1088 = vmatprep.mubr.bf16.mxu0 0
      %1089 = vmatmul.mubr.bf16.gmra.mrb[0].mxu0 %v966
      %v1090 = vpop.f32.mrb[0].mxu0
      %v1091 = vadd.f32 0.0, %v1090
      %v1092 = vpop.f32.mrb[0].mxu0
      %v1093 = vpop.f32.mrb[0].mxu0
      %v1094 = vadd.f32 0.0, %v1093
      %v1095 = vpop.f32.mrb[0].mxu0
      %1096 = vmatprep.mubr.bf16.mxu0 0
      %1097 = vmatmul.mubr.bf16.gmra.mrb[0].mxu0 %v968
      %v1098 = vpop.f32.mrb[0].mxu0
      %v1099 = vadd.f32 0.0, %v1098
      %v1100 = vpop.f32.mrb[0].mxu0
      %v1101 = vpop.f32.mrb[0].mxu0
      %v1102 = vadd.f32 0.0, %v1101
      %v1103 = vpop.f32.mrb[0].mxu0
      %1104 = vmatprep.mubr.bf16.mxu0 0
      %1105 = vmatmul.mubr.bf16.gmra.mrb[0].mxu0 %v970
      %v1106 = vpop.f32.mrb[0].mxu0
      %v1107 = vadd.f32 0.0, %v1106
      %v1108 = vpop.f32.mrb[0].mxu0
      %v1109 = vpop.f32.mrb[0].mxu0
      %v1110 = vadd.f32 0.0, %v1109
      %v1111 = vpop.f32.mrb[0].mxu0
      %1112 = vmatprep.mubr.bf16.mxu0 0
      %1113 = vmatmul.mubr.bf16.gmra.mrb[0].mxu0 %v972
      %v1114 = vpop.f32.mrb[0].mxu0
      %v1115 = vadd.f32 0.0, %v1114
      %v1116 = vpop.f32.mrb[0].mxu0
      %v1117 = vpop.f32.mrb[0].mxu0
      %v1118 = vadd.f32 0.0, %v1117
      %v1119 = vpop.f32.mrb[0].mxu0
      %1120 = vmatprep.mubr.bf16.mxu0 0
      %1121 = vmatmul.mubr.bf16.gmra.mrb[0].mxu0 %v974
      %v1122 = vpop.f32.mrb[0].mxu0
      %v1123 = vadd.f32 0.0, %v1122
      %v1124 = vpop.f32.mrb[0].mxu0
      %v1125 = vpop.f32.mrb[0].mxu0
      %v1126 = vadd.f32 0.0, %v1125
      %v1127 = vpop.f32.mrb[0].mxu0
      %1128 = vmatprep.mubr.bf16.mxu0 0
      %1129 = vmatmul.mubr.bf16.gmra.mrb[0].mxu0 %v976
      %v1130 = vpop.f32.mrb[0].mxu0
      %v1131 = vadd.f32 0.0, %v1130
      %v1132 = vpop.f32.mrb[0].mxu0
      %v1133 = vpop.f32.mrb[0].mxu0
      %v1134 = vadd.f32 0.0, %v1133
      %v1135 = vpop.f32.mrb[0].mxu0
      %1136 = vmatprep.mubr.bf16.mxu0 0
      %1137 = vmatmul.mubr.bf16.gmra.mrb[0].mxu0 %v978
      %v1138 = vpop.f32.mrb[0].mxu0
      %v1139 = vadd.f32 0.0, %v1138
      %v1140 = vpop.f32.mrb[0].mxu0
      %v1141 = vpop.f32.mrb[0].mxu0
      %v1142 = vadd.f32 0.0, %v1141
      %v1143 = vpop.f32.mrb[0].mxu0
      %1144 = vdwg.mxu0
      %v1147 = vunpack.c.l.b16 %v937
      %v1148 = vunpack.c.l.b16 %v938
      %v1149 = vpack.c.b16 %v1148, %v1147
      %v1150 = vsel %vm947, %v902, 0
      %v1153 = vsel %vm980, %v1149, 0
      %1155 = vmatprep.subr.bf16.mxu0 0
      %1156 = vmatpush1.bf16.msra.mxu0 %v1153
      %1157 = vmatprep.subr.bf16.mxu0 0
      %1158 = vmatpush1.bf16.msra.mxu0 0
      %1159 = vmatprep.subr.bf16.mxu0 0
      %1160 = vmatpush1.bf16.msra.mxu0 0
      %1161 = vmatprep.subr.bf16.mxu0 0
      %1162 = vmatpush1.bf16.msra.mxu0 0
      %1163 = vmatprep.subr.bf16.mxu0 0
      %1164 = vmatpush1.bf16.msra.mxu0 0
      %1165 = vmatprep.subr.bf16.mxu0 0
      %1166 = vmatpush1.bf16.msra.mxu0 0
      %1167 = vmatprep.subr.bf16.mxu0 0
      %1168 = vmatpush1.bf16.msra.mxu0 0
      %1169 = vmatprep.subr.bf16.mxu0 0
      %1170 = vmatpush1.bf16.msra.mxu0 0
      %1171 = vmatprep.subr.bf16.mxu0 0
      %1172 = vmatpush1.bf16.msra.mxu0 0
      %1173 = vmatprep.subr.bf16.mxu0 0
      %1174 = vmatpush1.bf16.msra.mxu0 0
      %1175 = vmatprep.subr.bf16.mxu0 0
      %1176 = vmatpush1.bf16.msra.mxu0 0
      %1177 = vmatprep.subr.bf16.mxu0 0
      %1178 = vmatpush1.bf16.msra.mxu0 0
      %1179 = vmatprep.subr.bf16.mxu0 0
      %1180 = vmatpush1.bf16.msra.mxu0 0
      %1181 = vmatprep.subr.bf16.mxu0 0
      %1182 = vmatpush1.bf16.msra.mxu0 0
      %1183 = vmatprep.subr.bf16.mxu0 0
      %1184 = vmatpush1.bf16.msra.mxu0 0
      %1185 = vmatprep.subr.bf16.mxu0 0
      %1186 = vmatpush1.bf16.msra.mxu0 0
      %1187 = vmatprep.mubr.bf16.mxu0 0
      %1188 = vmatmul.mubr.bf16.gmra.mrb[0].mxu0 %v1150
      %v1189 = vpop.f32.mrb[0].mxu0
      %v1190 = vadd.f32 %v1019, %v1189
      %v1191 = vpop.f32.mrb[0].mxu0
      %v1192 = vpop.f32.mrb[0].mxu0
      %v1193 = vadd.f32 %v1022, %v1192
      %v1194 = vpop.f32.mrb[0].mxu0
      %1195 = vmatprep.mubr.bf16.mxu0 0
      %1196 = vmatmul.mubr.bf16.gmra.mrb[0].mxu0 %v948
      %v1197 = vpop.f32.mrb[0].mxu0
      %v1198 = vadd.f32 %v1027, %v1197
      %v1199 = vpop.f32.mrb[0].mxu0
      %v1200 = vpop.f32.mrb[0].mxu0
      %v1201 = vadd.f32 %v1030, %v1200
      %v1202 = vpop.f32.mrb[0].mxu0
      %1203 = vmatprep.mubr.bf16.mxu0 0
      %1204 = vmatmul.mubr.bf16.gmra.mrb[0].mxu0 %v950
      %v1205 = vpop.f32.mrb[0].mxu0
      %v1206 = vadd.f32 %v1035, %v1205
      %v1207 = vpop.f32.mrb[0].mxu0
      %v1208 = vpop.f32.mrb[0].mxu0
      %v1209 = vadd.f32 %v1038, %v1208
      %v1210 = vpop.f32.mrb[0].mxu0
      %1211 = vmatprep.mubr.bf16.mxu0 0
      %1212 = vmatmul.mubr.bf16.gmra.mrb[0].mxu0 %v952
      %v1213 = vpop.f32.mrb[0].mxu0
      %v1214 = vadd.f32 %v1043, %v1213
      %v1215 = vpop.f32.mrb[0].mxu0
      %v1216 = vpop.f32.mrb[0].mxu0
      %v1217 = vadd.f32 %v1046, %v1216
      %v1218 = vpop.f32.mrb[0].mxu0
      %1219 = vmatprep.mubr.bf16.mxu0 0
      %1220 = vmatmul.mubr.bf16.gmra.mrb[0].mxu0 %v954
      %v1221 = vpop.f32.mrb[0].mxu0
      %v1222 = vadd.f32 %v1051, %v1221
      %v1223 = vpop.f32.mrb[0].mxu0
      %v1224 = vpop.f32.mrb[0].mxu0
      %v1225 = vadd.f32 %v1054, %v1224
      %v1226 = vpop.f32.mrb[0].mxu0
      %1227 = vmatprep.mubr.bf16.mxu0 0
      %1228 = vmatmul.mubr.bf16.gmra.mrb[0].mxu0 %v956
      %v1229 = vpop.f32.mrb[0].mxu0
      %v1230 = vadd.f32 %v1059, %v1229
      %v1231 = vpop.f32.mrb[0].mxu0
      %v1232 = vpop.f32.mrb[0].mxu0
      %v1233 = vadd.f32 %v1062, %v1232
      %v1234 = vpop.f32.mrb[0].mxu0
      %1235 = vmatprep.mubr.bf16.mxu0 0
      %1236 = vmatmul.mubr.bf16.gmra.mrb[0].mxu0 %v958
      %v1237 = vpop.f32.mrb[0].mxu0
      %v1238 = vadd.f32 %v1067, %v1237
      %v1239 = vpop.f32.mrb[0].mxu0
      %v1240 = vpop.f32.mrb[0].mxu0
      %v1241 = vadd.f32 %v1070, %v1240
      %v1242 = vpop.f32.mrb[0].mxu0
      %1243 = vmatprep.mubr.bf16.mxu0 0
      %1244 = vmatmul.mubr.bf16.gmra.mrb[0].mxu0 %v960
      %v1245 = vpop.f32.mrb[0].mxu0
      %v1246 = vadd.f32 %v1075, %v1245
      %v1247 = vpop.f32.mrb[0].mxu0
      %v1248 = vpop.f32.mrb[0].mxu0
      %v1249 = vadd.f32 %v1078, %v1248
      %v1250 = vpop.f32.mrb[0].mxu0
      %1251 = vmatprep.mubr.bf16.mxu0 0
      %1252 = vmatmul.mubr.bf16.gmra.mrb[0].mxu0 %v962
      %v1253 = vpop.f32.mrb[0].mxu0
      %v1254 = vadd.f32 %v1083, %v1253
      %v1255 = vpop.f32.mrb[0].mxu0
      %v1256 = vpop.f32.mrb[0].mxu0
      %v1257 = vadd.f32 %v1086, %v1256
      %v1258 = vpop.f32.mrb[0].mxu0
      %1259 = vmatprep.mubr.bf16.mxu0 0
      %1260 = vmatmul.mubr.bf16.gmra.mrb[0].mxu0 %v964
      %v1261 = vpop.f32.mrb[0].mxu0
      %v1262 = vadd.f32 %v1091, %v1261
      %v1263 = vpop.f32.mrb[0].mxu0
      %v1264 = vpop.f32.mrb[0].mxu0
      %v1265 = vadd.f32 %v1094, %v1264
      %v1266 = vpop.f32.mrb[0].mxu0
      %1267 = vmatprep.mubr.bf16.mxu0 0
      %1268 = vmatmul.mubr.bf16.gmra.mrb[0].mxu0 %v966
      %v1269 = vpop.f32.mrb[0].mxu0
      %v1270 = vadd.f32 %v1099, %v1269
      %v1271 = vpop.f32.mrb[0].mxu0
      %v1272 = vpop.f32.mrb[0].mxu0
      %v1273 = vadd.f32 %v1102, %v1272
      %v1274 = vpop.f32.mrb[0].mxu0
      %1275 = vmatprep.mubr.bf16.mxu0 0
      %1276 = vmatmul.mubr.bf16.gmra.mrb[0].mxu0 %v968
      %v1277 = vpop.f32.mrb[0].mxu0
      %v1278 = vadd.f32 %v1107, %v1277
      %v1279 = vpop.f32.mrb[0].mxu0
      %v1280 = vpop.f32.mrb[0].mxu0
      %v1281 = vadd.f32 %v1110, %v1280
      %v1282 = vpop.f32.mrb[0].mxu0
      %1283 = vmatprep.mubr.bf16.mxu0 0
      %1284 = vmatmul.mubr.bf16.gmra.mrb[0].mxu0 %v970
      %v1285 = vpop.f32.mrb[0].mxu0
      %v1286 = vadd.f32 %v1115, %v1285
      %v1287 = vpop.f32.mrb[0].mxu0
      %v1288 = vpop.f32.mrb[0].mxu0
      %v1289 = vadd.f32 %v1118, %v1288
      %v1290 = vpop.f32.mrb[0].mxu0
      %1291 = vmatprep.mubr.bf16.mxu0 0
      %1292 = vmatmul.mubr.bf16.gmra.mrb[0].mxu0 %v972
      %v1293 = vpop.f32.mrb[0].mxu0
      %v1294 = vadd.f32 %v1123, %v1293
      %v1295 = vpop.f32.mrb[0].mxu0
      %v1296 = vpop.f32.mrb[0].mxu0
      %v1297 = vadd.f32 %v1126, %v1296
      %v1298 = vpop.f32.mrb[0].mxu0
      %1299 = vmatprep.mubr.bf16.mxu0 0
      %1300 = vmatmul.mubr.bf16.gmra.mrb[0].mxu0 %v974
      %v1301 = vpop.f32.mrb[0].mxu0
      %v1302 = vadd.f32 %v1131, %v1301
      %v1303 = vpop.f32.mrb[0].mxu0
      %v1304 = vpop.f32.mrb[0].mxu0
      %v1305 = vadd.f32 %v1134, %v1304
      %v1306 = vpop.f32.mrb[0].mxu0
      %1307 = vmatprep.mubr.bf16.mxu0 0
      %1308 = vmatmul.mubr.bf16.gmra.mrb[0].mxu0 %v976
      %v1309 = vpop.f32.mrb[0].mxu0
      %v1310 = vadd.f32 %v1139, %v1309
      %v1311 = vpop.f32.mrb[0].mxu0
      %v1312 = vpop.f32.mrb[0].mxu0
      %v1313 = vadd.f32 %v1142, %v1312
      %v1314 = vpop.f32.mrb[0].mxu0
      %1315 = vdwg.mxu0
      %s1316 = scalar_lea.vmem %s2, 16
      %v1317 = vld [vmem:[%s1316] sm:$0xf]
      %v1318 = vld [vmem:[%s1316 + $0x4] sm:$0x3]
      %v1321 = vunpack.c.l.b16 %v1317
      %v1322 = vunpack.c.l.b16 %v1318
      %v1323 = vpack.c.b16 %v1322, %v1321
      %v1324 = vsel %vm947, %v936, 0
      %v1327 = vsel %vm980, %v1323, 0
      %1329 = vmatprep.subr.bf16.mxu0 0
      %1330 = vmatpush1.bf16.msra.mxu0 %v1327
      %1331 = vmatprep.subr.bf16.mxu0 0
      %1332 = vmatpush1.bf16.msra.mxu0 0
      %1333 = vmatprep.subr.bf16.mxu0 0
      %1334 = vmatpush1.bf16.msra.mxu0 0
      %1335 = vmatprep.subr.bf16.mxu0 0
      %1336 = vmatpush1.bf16.msra.mxu0 0
      %1337 = vmatprep.subr.bf16.mxu0 0
      %1338 = vmatpush1.bf16.msra.mxu0 0
      %1339 = vmatprep.subr.bf16.mxu0 0
      %1340 = vmatpush1.bf16.msra.mxu0 0
      %1341 = vmatprep.subr.bf16.mxu0 0
      %1342 = vmatpush1.bf16.msra.mxu0 0
      %1343 = vmatprep.subr.bf16.mxu0 0
      %1344 = vmatpush1.bf16.msra.mxu0 0
      %1345 = vmatprep.subr.bf16.mxu0 0
      %1346 = vmatpush1.bf16.msra.mxu0 0
      %1347 = vmatprep.subr.bf16.mxu0 0
      %1348 = vmatpush1.bf16.msra.mxu0 0
      %1349 = vmatprep.subr.bf16.mxu0 0
      %1350 = vmatpush1.bf16.msra.mxu0 0
      %1351 = vmatprep.subr.bf16.mxu0 0
      %1352 = vmatpush1.bf16.msra.mxu0 0
      %1353 = vmatprep.subr.bf16.mxu0 0
      %1354 = vmatpush1.bf16.msra.mxu0 0
      %1355 = vmatprep.subr.bf16.mxu0 0
      %1356 = vmatpush1.bf16.msra.mxu0 0
      %1357 = vmatprep.subr.bf16.mxu0 0
      %1358 = vmatpush1.bf16.msra.mxu0 0
      %1359 = vmatprep.subr.bf16.mxu0 0
      %1360 = vmatpush1.bf16.msra.mxu0 0
      %1361 = vmatprep.mubr.bf16.mxu0 0
      %1362 = vmatmul.mubr.bf16.gmra.mrb[0].mxu0 %v950
      %v1363 = vpop.f32.mrb[0].mxu0
      %v1364 = vadd.f32 0.0, %v1363
      %v1365 = vpop.f32.mrb[0].mxu0
      %v1366 = vpop.f32.mrb[0].mxu0
      %v1367 = vadd.f32 0.0, %v1366
      %v1368 = vpop.f32.mrb[0].mxu0
      %1369 = vmatprep.mubr.bf16.mxu0 0
      %1370 = vmatmul.mubr.bf16.gmra.mrb[0].mxu0 %v952
      %v1371 = vpop.f32.mrb[0].mxu0
      %v1372 = vadd.f32 0.0, %v1371
      %v1373 = vpop.f32.mrb[0].mxu0
      %v1374 = vpop.f32.mrb[0].mxu0
      %v1375 = vadd.f32 0.0, %v1374
      %v1376 = vpop.f32.mrb[0].mxu0
      %1377 = vmatprep.mubr.bf16.mxu0 0
      %1378 = vmatmul.mubr.bf16.gmra.mrb[0].mxu0 %v954
      %v1379 = vpop.f32.mrb[0].mxu0
      %v1380 = vadd.f32 0.0, %v1379
      %v1381 = vpop.f32.mrb[0].mxu0
      %v1382 = vpop.f32.mrb[0].mxu0
      %v1383 = vadd.f32 0.0, %v1382
      %v1384 = vpop.f32.mrb[0].mxu0
      %1385 = vmatprep.mubr.bf16.mxu0 0
      %1386 = vmatmul.mubr.bf16.gmra.mrb[0].mxu0 %v956
      %v1387 = vpop.f32.mrb[0].mxu0
      %v1388 = vadd.f32 0.0, %v1387
      %v1389 = vpop.f32.mrb[0].mxu0
      %v1390 = vpop.f32.mrb[0].mxu0
      %v1391 = vadd.f32 0.0, %v1390
      %v1392 = vpop.f32.mrb[0].mxu0
      %1393 = vmatprep.mubr.bf16.mxu0 0
      %1394 = vmatmul.mubr.bf16.gmra.mrb[0].mxu0 %v958
      %v1395 = vpop.f32.mrb[0].mxu0
      %v1396 = vadd.f32 0.0, %v1395
      %v1397 = vpop.f32.mrb[0].mxu0
      %v1398 = vpop.f32.mrb[0].mxu0
      %v1399 = vadd.f32 0.0, %v1398
      %v1400 = vpop.f32.mrb[0].mxu0
      %1401 = vmatprep.mubr.bf16.mxu0 0
      %1402 = vmatmul.mubr.bf16.gmra.mrb[0].mxu0 %v960
      %v1403 = vpop.f32.mrb[0].mxu0
      %v1404 = vadd.f32 0.0, %v1403
      %v1405 = vpop.f32.mrb[0].mxu0
      %v1406 = vpop.f32.mrb[0].mxu0
      %v1407 = vadd.f32 0.0, %v1406
      %v1408 = vpop.f32.mrb[0].mxu0
      %1409 = vmatprep.mubr.bf16.mxu0 0
      %1410 = vmatmul.mubr.bf16.gmra.mrb[0].mxu0 %v962
      %v1411 = vpop.f32.mrb[0].mxu0
      %v1412 = vadd.f32 0.0, %v1411
      %v1413 = vpop.f32.mrb[0].mxu0
      %v1414 = vpop.f32.mrb[0].mxu0
      %v1415 = vadd.f32 0.0, %v1414
      %v1416 = vpop.f32.mrb[0].mxu0
      %1417 = vmatprep.mubr.bf16.mxu0 0
      %1418 = vmatmul.mubr.bf16.gmra.mrb[0].mxu0 %v964
      %v1419 = vpop.f32.mrb[0].mxu0
      %v1420 = vadd.f32 0.0, %v1419
      %v1421 = vpop.f32.mrb[0].mxu0
      %v1422 = vpop.f32.mrb[0].mxu0
      %v1423 = vadd.f32 0.0, %v1422
      %v1424 = vpop.f32.mrb[0].mxu0
      %1425 = vmatprep.mubr.bf16.mxu0 0
      %1426 = vmatmul.mubr.bf16.gmra.mrb[0].mxu0 %v966
      %v1427 = vpop.f32.mrb[0].mxu0
      %v1428 = vadd.f32 0.0, %v1427
      %v1429 = vpop.f32.mrb[0].mxu0
      %v1430 = vpop.f32.mrb[0].mxu0
      %v1431 = vadd.f32 0.0, %v1430
      %v1432 = vpop.f32.mrb[0].mxu0
      %1433 = vmatprep.mubr.bf16.mxu0 0
      %1434 = vmatmul.mubr.bf16.gmra.mrb[0].mxu0 %v968
      %v1435 = vpop.f32.mrb[0].mxu0
      %v1436 = vadd.f32 0.0, %v1435
      %v1437 = vpop.f32.mrb[0].mxu0
      %v1438 = vpop.f32.mrb[0].mxu0
      %v1439 = vadd.f32 0.0, %v1438
      %v1440 = vpop.f32.mrb[0].mxu0
      %1441 = vmatprep.mubr.bf16.mxu0 0
      %1442 = vmatmul.mubr.bf16.gmra.mrb[0].mxu0 %v970
      %v1443 = vpop.f32.mrb[0].mxu0
      %v1444 = vadd.f32 0.0, %v1443
      %v1445 = vpop.f32.mrb[0].mxu0
      %v1446 = vpop.f32.mrb[0].mxu0
      %v1447 = vadd.f32 0.0, %v1446
      %v1448 = vpop.f32.mrb[0].mxu0
      %1449 = vmatprep.mubr.bf16.mxu0 0
      %1450 = vmatmul.mubr.bf16.gmra.mrb[0].mxu0 %v972
      %v1451 = vpop.f32.mrb[0].mxu0
      %v1452 = vadd.f32 0.0, %v1451
      %v1453 = vpop.f32.mrb[0].mxu0
      %v1454 = vpop.f32.mrb[0].mxu0
      %v1455 = vadd.f32 0.0, %v1454
      %v1456 = vpop.f32.mrb[0].mxu0
      %1457 = vmatprep.mubr.bf16.mxu0 0
      %1458 = vmatmul.mubr.bf16.gmra.mrb[0].mxu0 %v974
      %v1459 = vpop.f32.mrb[0].mxu0
      %v1460 = vadd.f32 0.0, %v1459
      %v1461 = vpop.f32.mrb[0].mxu0
      %v1462 = vpop.f32.mrb[0].mxu0
      %v1463 = vadd.f32 0.0, %v1462
      %v1464 = vpop.f32.mrb[0].mxu0
      %1465 = vmatprep.mubr.bf16.mxu0 0
      %1466 = vmatmul.mubr.bf16.gmra.mrb[0].mxu0 %v976
      %v1467 = vpop.f32.mrb[0].mxu0
      %v1468 = vadd.f32 0.0, %v1467
      %v1469 = vpop.f32.mrb[0].mxu0
      %v1470 = vpop.f32.mrb[0].mxu0
      %v1471 = vadd.f32 0.0, %v1470
      %v1472 = vpop.f32.mrb[0].mxu0
      %1473 = vmatprep.mubr.bf16.mxu0 0
      %1474 = vmatmul.mubr.bf16.gmra.mrb[0].mxu0 %v978
      %v1475 = vpop.f32.mrb[0].mxu0
      %v1476 = vadd.f32 0.0, %v1475
      %v1477 = vpop.f32.mrb[0].mxu0
      %v1478 = vpop.f32.mrb[0].mxu0
      %v1479 = vadd.f32 0.0, %v1478
      %v1480 = vpop.f32.mrb[0].mxu0
      %1481 = vmatprep.mubr.bf16.mxu0 0
      %1482 = vmatmul.mubr.bf16.gmra.mrb[0].mxu0 %v1324
      %v1483 = vpop.f32.mrb[0].mxu0
      %v1484 = vadd.f32 0.0, %v1483
      %v1485 = vpop.f32.mrb[0].mxu0
      %v1486 = vpop.f32.mrb[0].mxu0
      %v1487 = vadd.f32 0.0, %v1486
      %v1488 = vpop.f32.mrb[0].mxu0
      %1489 = vdwg.mxu0
      %v1490 = vadd.f32 %v1190, %v1364
      %v1491 = vadd.f32 %v1193, %v1367
      %v1492 = vadd.f32 %v1198, %v1372
      %v1493 = vadd.f32 %v1201, %v1375
      %v1494 = vadd.f32 %v1206, %v1380
      %v1495 = vadd.f32 %v1209, %v1383
      %v1496 = vadd.f32 %v1214, %v1388
      %v1497 = vadd.f32 %v1217, %v1391
      %v1498 = vadd.f32 %v1222, %v1396
      %v1499 = vadd.f32 %v1225, %v1399
      %v1500 = vadd.f32 %v1230, %v1404
      %v1501 = vadd.f32 %v1233, %v1407
      %v1502 = vadd.f32 %v1238, %v1412
      %v1503 = vadd.f32 %v1241, %v1415
      %v1504 = vadd.f32 %v1246, %v1420
      %v1505 = vadd.f32 %v1249, %v1423
      %v1506 = vadd.f32 %v1254, %v1428
      %v1507 = vadd.f32 %v1257, %v1431
      %v1508 = vadd.f32 %v1262, %v1436
      %v1509 = vadd.f32 %v1265, %v1439
      %v1510 = vadd.f32 %v1270, %v1444
      %v1511 = vadd.f32 %v1273, %v1447
      %v1512 = vadd.f32 %v1278, %v1452
      %v1513 = vadd.f32 %v1281, %v1455
      %v1514 = vadd.f32 %v1286, %v1460
      %v1515 = vadd.f32 %v1289, %v1463
      %v1516 = vadd.f32 %v1294, %v1468
      %v1517 = vadd.f32 %v1297, %v1471
      %v1518 = vadd.f32 %v1302, %v1476
      %v1519 = vadd.f32 %v1305, %v1479
      %v1520 = vadd.f32 %v1310, %v1484
      %v1521 = vadd.f32 %v1313, %v1487
      %v1522 = vld [vmem:[%s3] sm:$0x1]
      %v1524 = vlaneseq
      %v1525 = vshrl.u32 %v1524, 7
      %v1526 = vsub.s32 0, %v1525
      %v1527 = vrot.slane %v1522, %v1526
      %v1529 = vadd.f32 %v1490, %v1527
      %v1530 = vadd.f32 %v1491, %v1527
      %v1531 = vadd.f32 %v1492, %v1527
      %v1532 = vadd.f32 %v1493, %v1527
      %v1533 = vadd.f32 %v1494, %v1527
      %v1534 = vadd.f32 %v1495, %v1527
      %v1535 = vadd.f32 %v1496, %v1527
      %v1536 = vadd.f32 %v1497, %v1527
      %v1537 = vadd.f32 %v1498, %v1527
      %v1538 = vadd.f32 %v1499, %v1527
      %v1539 = vadd.f32 %v1500, %v1527
      %v1540 = vadd.f32 %v1501, %v1527
      %v1541 = vadd.f32 %v1502, %v1527
      %v1542 = vadd.f32 %v1503, %v1527
      %v1543 = vadd.f32 %v1504, %v1527
      %v1544 = vadd.f32 %v1505, %v1527
      %v1545 = vadd.f32 %v1506, %v1527
      %v1546 = vadd.f32 %v1507, %v1527
      %v1547 = vadd.f32 %v1508, %v1527
      %v1548 = vadd.f32 %v1509, %v1527
      %v1549 = vadd.f32 %v1510, %v1527
      %v1550 = vadd.f32 %v1511, %v1527
      %v1551 = vadd.f32 %v1512, %v1527
      %v1552 = vadd.f32 %v1513, %v1527
      %v1553 = vadd.f32 %v1514, %v1527
      %v1554 = vadd.f32 %v1515, %v1527
      %v1555 = vadd.f32 %v1516, %v1527
      %v1556 = vadd.f32 %v1517, %v1527
      %v1557 = vadd.f32 %v1518, %v1527
      %v1558 = vadd.f32 %v1519, %v1527
      %v1559 = vadd.f32 %v1520, %v1527
      %v1560 = vadd.f32 %v1521, %v1527
      %v1561 = vmax.f32 %v1529, 0.0
      %v1562 = vmax.f32 %v1530, 0.0
      %v1563 = vmax.f32 %v1531, 0.0
      %v1564 = vmax.f32 %v1532, 0.0
      %v1565 = vmax.f32 %v1533, 0.0
      %v1566 = vmax.f32 %v1534, 0.0
      %v1567 = vmax.f32 %v1535, 0.0
      %v1568 = vmax.f32 %v1536, 0.0
      %v1569 = vmax.f32 %v1537, 0.0
      %v1570 = vmax.f32 %v1538, 0.0
      %v1571 = vmax.f32 %v1539, 0.0
      %v1572 = vmax.f32 %v1540, 0.0
      %v1573 = vmax.f32 %v1541, 0.0
      %v1574 = vmax.f32 %v1542, 0.0
      %v1575 = vmax.f32 %v1543, 0.0
      %v1576 = vmax.f32 %v1544, 0.0
      %v1577 = vmax.f32 %v1545, 0.0
      %v1578 = vmax.f32 %v1546, 0.0
      %v1579 = vmax.f32 %v1547, 0.0
      %v1580 = vmax.f32 %v1548, 0.0
      %v1581 = vmax.f32 %v1549, 0.0
      %v1582 = vmax.f32 %v1550, 0.0
      %v1583 = vmax.f32 %v1551, 0.0
      %v1584 = vmax.f32 %v1552, 0.0
      %v1585 = vmax.f32 %v1553, 0.0
      %v1586 = vmax.f32 %v1554, 0.0
      %v1587 = vmax.f32 %v1555, 0.0
      %v1588 = vmax.f32 %v1556, 0.0
      %v1589 = vmax.f32 %v1557, 0.0
      %v1590 = vmax.f32 %v1558, 0.0
      %v1591 = vmax.f32 %v1559, 0.0
      %v1592 = vmax.f32 %v1560, 0.0
      %1593 = vst.msk [vmem:[%s318] sm:$0xff] %vm900, %v1561
      %1594 = vst.msk [vmem:[%s318 + $0x8] sm:$0xff] %vm900, %v1562
      %1595 = vst.msk [vmem:[%s318 + $0x10] sm:$0xff] %vm900, %v1563
      %1596 = vst.msk [vmem:[%s318 + $0x18] sm:$0xff] %vm900, %v1564
      %1597 = vst.msk [vmem:[%s318 + $0x20] sm:$0xff] %vm900, %v1565
      %1598 = vst.msk [vmem:[%s318 + $0x28] sm:$0xff] %vm900, %v1566
      %1599 = vst.msk [vmem:[%s318 + $0x30] sm:$0xff] %vm900, %v1567
      %1600 = vst.msk [vmem:[%s318 + $0x38] sm:$0xff] %vm900, %v1568
      %1601 = vst.msk [vmem:[%s318 + $0x40] sm:$0xff] %vm900, %v1569
      %1602 = vst.msk [vmem:[%s318 + $0x48] sm:$0xff] %vm900, %v1570
      %1603 = vst.msk [vmem:[%s318 + $0x50] sm:$0xff] %vm900, %v1571
      %1604 = vst.msk [vmem:[%s318 + $0x58] sm:$0xff] %vm900, %v1572
      %1605 = vst.msk [vmem:[%s318 + $0x60] sm:$0xff] %vm900, %v1573
      %1606 = vst.msk [vmem:[%s318 + $0x68] sm:$0xff] %vm900, %v1574
      %1607 = vst.msk [vmem:[%s318 + $0x70] sm:$0xff] %vm900, %v1575
      %1608 = vst.msk [vmem:[%s318 + $0x78] sm:$0xff] %vm900, %v1576
      %1609 = vst.msk [vmem:[%s318 + $0x80] sm:$0xff] %vm900, %v1577
      %1610 = vst.msk [vmem:[%s318 + $0x88] sm:$0xff] %vm900, %v1578
      %1611 = vst.msk [vmem:[%s318 + $0x90] sm:$0xff] %vm900, %v1579
      %1612 = vst.msk [vmem:[%s318 + $0x98] sm:$0xff] %vm900, %v1580
      %1613 = vst.msk [vmem:[%s318 + $0xa0] sm:$0xff] %vm900, %v1581
      %1614 = vst.msk [vmem:[%s318 + $0xa8] sm:$0xff] %vm900, %v1582
      %1615 = vst.msk [vmem:[%s318 + $0xb0] sm:$0xff] %vm900, %v1583
      %1616 = vst.msk [vmem:[%s318 + $0xb8] sm:$0xff] %vm900, %v1584
      %1617 = vst.msk [vmem:[%s318 + $0xc0] sm:$0xff] %vm900, %v1585
      %1618 = vst.msk [vmem:[%s318 + $0xc8] sm:$0xff] %vm900, %v1586
      %1619 = vst.msk [vmem:[%s318 + $0xd0] sm:$0xff] %vm900, %v1587
      %1620 = vst.msk [vmem:[%s318 + $0xd8] sm:$0xff] %vm900, %v1588
      %1621 = vst.msk [vmem:[%s318 + $0xe0] sm:$0xff] %vm900, %v1589
      %1622 = vst.msk [vmem:[%s318 + $0xe8] sm:$0xff] %vm900, %v1590
      %1623 = vst.msk [vmem:[%s318 + $0xf0] sm:$0xff] %vm900, %v1591
      %1624 = vst.msk [vmem:[%s318 + $0xf8] sm:$0xff] %vm900, %v1592
      %s1625 = smul.u32 16, %s20
      %p1626 = scmp.lt.s32.totalorder %s19, 1
      %s1627 = scalar_select %p1626, %s19, 1
      %p1628 = scmp.lt.s32.totalorder %s1625, 15
      %s1629 = scalar_select %p1628, %s1625, 15
      %s1630 = smul.addr %s1629, 2
      %s1631 = smul.addr %s1627, 32
      %s1632 = sadd.s32 %s1630, %s1631
      %s1633 = smul.addr %s1632, 8
      %s1634 = scalar_lea.vmem %s4, %s1633
      // Predicated region
      $region37: #{tpu_custom_call.1} parent=35 // pred_check
        %p1635 = pneg %p149
      $region38: #{tpu_custom_call.1} parent=35 // pred_check_branch
        %1637 = sbr.rel (%p1635) target = $region40
      $region39: #{tpu_custom_call.1} parent=35 // pred_region
        %s1638 = smul.u32 16, %s20
      $region40: #{tpu_custom_call.1} parent=35 // pred_fallthru
        _
    $region36: #{tpu_custom_call.1} parent=5 // pred_fallthru
      _
    %p1639 = scmp.le.s32.totalorder 2, %s10
    // Predicated region
    $region41: #{tpu_custom_call.1} parent=5 // pred_check
      %p1640 = pneg %p1639
    $region42: #{tpu_custom_call.1} parent=5 // pred_check_branch
      %1642 = sbr.rel (%p1640) target = $region44
    $region43: #{tpu_custom_call.1} parent=5 // pred_region
      %s1643 = ssub.s32 %s10, 2
      // Predicated region
      $region45: #{tpu_custom_call.1} parent=43 // pred_check
        %p1644 = pneg %p155
      $region46: #{tpu_custom_call.1} parent=43 // pred_check_branch
        %1646 = sbr.rel (%p1644) target = $region48
      $region47: #{tpu_custom_call.1} parent=43 // pred_region
        %s1647 = smul.u32 16, %s22
        %p1648 = scmp.lt.s32.totalorder %s21, 1
        %s1649 = scalar_select %p1648, %s21, 1
        %p1650 = scmp.lt.s32.totalorder %s1647, 15
        %s1651 = scalar_select %p1650, %s1647, 15
        %s1652 = smul.addr %s1651, 2
        %s1653 = smul.addr %s1649, 32
        %s1654 = sadd.s32 %s1652, %s1653
        %s1655 = smul.addr %s1654, 8
        %s1656 = scalar_lea.vmem %s4, %s1655
      $region48: #{tpu_custom_call.1} parent=43 // pred_fallthru
        _
    $region44: #{tpu_custom_call.1} parent=5 // pred_fallthru
      _
  $region6: #{tpu_custom_call.1} parent=0 // loop_footer
    %s14 = sadd.s32 1, %s10
  $region7: #{tpu_custom_call.1} parent=0 // loop_footer_branch
    %9 = sbr.rel target = $region3
  $region8: #{tpu_custom_call.1} parent=0 // loop_exit
    _

</llo_original>
